<compile_context>
chip_gen: v7x
topology: tpu7x:2x2x1
jax: 0.10.0
libtpu: 0.0.40
codegen_flags: <defaults>
</compile_context>

<pallas_src>
import functools

import jax
import jax.numpy as jnp
import numpy as np
from jax.experimental import pallas as pl
from jax.experimental.pallas import tpu as pltpu

NEG_SLOPE = 0.01          # nn.LeakyReLU default negative_slope

# ----- fixed module configuration -------------------------------------------
BATCH = 2
IN_CHANNELS = 4
IMG = 16
C1, C2 = 8, 16            # out_channels
K, PAD, POOL = 3, 1, 2
H1 = IMG                  # conv1 spatial size (pad=1, k=3, s=1)
H1P = H1 // POOL          # 8
H2 = H1P                  # conv2 spatial size
H2P = H2 // POOL          # 4
NEURONS = 32
OUTPUT_SIZE = 10
PADDED_OUT = 128          # lane-dense head output
FLAT = C2 * H2P * H2P     # 256

# ----- bf16 operand-slab layout (row offsets, all multiples of 16) ----------
OFF_A1_0 = 0              # (32, 32)  conv1 row-shift, kh=0
OFF_A1_2 = 32             # (32, 32)  conv1 row-shift, kh=2
OFF_B1   = 64             # (192,128) conv1 lane matrices, kh=0,1,2 stacked row-wise
OFF_P1R  = 256            # (32, 32)  max-pool row select (rows 0-15: d=0, 16-31: d=1)
OFF_P1S0 = 288            # (128, 64) max-pool lane select d=0
OFF_P1S1 = 416            # (128, 64) max-pool lane select d=1
OFF_A2_0 = 544            # (16, 16)  conv2 row-shift, kh=0
OFF_A2_2 = 560            # (16, 16)  conv2 row-shift, kh=2
OFF_B2   = 576            # (192,128) conv2 lane matrices stacked
OFF_P2R  = 768            # 4 blocks of 16 rows; block hp: rows [OFF_P2R+16*hp, +2) = (2,16)
OFF_P2S  = 832            # (128, 64) avg-pool lane matrix (entries 1/2)
OFF_G1   = 960            # 4 blocks of (64,32): fc1 with NCHW flatten folded in
OFF_W2   = 1216           # (32, 32)
OFF_W3   = 1248           # (32,128)  fc3 padded to 128 output lanes
SLAB_ROWS = 1280

# ----- f32 bias-slab layout ---------------------------------------------------
OFFB_B1 = 0               # row 0, lanes 0:32
OFFB_B2 = 8               # row 8, lanes 0:32
OFFB_B3 = 16              # row 16, lanes 0:128 (-1e30 in the 118 padded lanes)
BIAS_ROWS = 24


def _leaky(x):
    return jnp.where(x > 0, x, NEG_SLOPE * x)


# =============================================================================
# Host-side construction of the structured matrices (done once at "init" time)
# =============================================================================
def _conv_row_select(n, h, kh_taps, pad):
    """A[kh]: (n*h, n*h). (A[kh] @ X)[row (n,hh)] = X[row (n, hh+kh-pad)] or 0."""
    a = np.zeros((kh_taps, n * h, n * h), np.float32)
    for kh in range(kh_taps):
        for nn in range(n):
            for hh in range(h):
                hi = hh + kh - pad
                if 0 <= hi < h:
                    a[kh, nn * h + hh, nn * h + hi] = 1.0
    return a


def _conv_lane_matrix(w_oihw, width, pad):
    """B[kh]: (W*Cin, W*Cout). Folds the kw taps + width zero-pad into weights."""
    cout, cin, kh_taps, kw_taps = w_oihw.shape
    b = np.zeros((kh_taps, width * cin, width * cout), np.float32)
    for kh in range(kh_taps):
        for w in range(width):
            for kw in range(kw_taps):
                wi = w + kw - pad
                if 0 <= wi < width:
                    b[kh, wi * cin:(wi + 1) * cin, w * cout:(w + 1) * cout] = (
                        w_oihw[:, :, kh, kw].T)
    return b


def _maxpool_row_select_stacked(n, h, pool):
    """(pool*n*(h/pool), n*h): row d*n*ho + nn*ho + hp selects input row (nn, hp*pool+d)."""
    ho = h // pool
    r = np.zeros((pool * n * ho, n * h), np.float32)
    for d in range(pool):
        for nn in range(n):
            for hp in range(ho):
                r[d * n * ho + nn * ho + hp, nn * h + hp * pool + d] = 1.0
    return r


def _pool_lane_select(width, c, pool):
    """S[d]: (W*C, (W/pool)*C) selecting lane ((pool*wp+d)*C + c)."""
    wo = width // pool
    s = np.zeros((pool, width * c, wo * c), np.float32)
    for d in range(pool):
        for wp in range(wo):
            for cc in range(c):
                s[d, (wp * pool + d) * c + cc, wp * c + cc] = 1.0
    return s


def _avgpool_row_blocks(n, h, pool):
    """R[hp]: (n, n*h) averaging input rows (nn, pool*hp+d) into output row nn."""
    ho = h // pool
    r = np.zeros((ho, n, n * h), np.float32)
    for hp in range(ho):
        for nn in range(n):
            for d in range(pool):
                r[hp, nn, nn * h + hp * pool + d] = 1.0 / pool
    return r


def _avgpool_lane_matrix(width, c, pool):
    wo = width // pool
    sa = np.zeros((width * c, wo * c), np.float32)
    for wp in range(wo):
        for cc in range(c):
            for d in range(pool):
                sa[(wp * pool + d) * c + cc, wp * c + cc] = 1.0 / pool
    return sa


def _fc1_blocks(w1_torch):
    """G[h]: (W2P*C2, NEURONS). Folds torch's NCHW flatten order into fc1.

    G[h][w*C2 + c, j] = w1_torch[j, c*(H2P*W2P) + h*W2P + w]
    """
    g = np.zeros((H2P, H2P * C2, w1_torch.shape[0]), np.float32)
    for h in range(H2P):
        for w in range(H2P):
            for c in range(C2):
                g[h, w * C2 + c, :] = w1_torch[:, c * H2P * H2P + h * H2P + w]
    return g


def prepare_net(params):
    """Pack all constant operands into one bf16 slab + one f32 bias slab."""
    c1w = np.asarray(params['conv1_w'], np.float32)   # (8, 4, 3, 3)  OIHW
    c2w = np.asarray(params['conv2_w'], np.float32)   # (16, 8, 3, 3)

    slab = np.zeros((SLAB_ROWS, 128), np.float32)

    # conv1 row-shift selection matrices (kh=1 is the identity -> not stored)
    c1a = _conv_row_select(BATCH, H1, K, PAD)                       # (3,32,32)
    slab[OFF_A1_0:OFF_A1_0 + BATCH * H1, :BATCH * H1] = c1a[0]
    slab[OFF_A1_2:OFF_A1_2 + BATCH * H1, :BATCH * H1] = c1a[2]
    # conv1 lane matrices stacked row-wise (kh = 0,1,2)
    c1b = _conv_lane_matrix(c1w, H1, PAD).reshape(K * H1 * IN_CHANNELS, H1 * C1)
    slab[OFF_B1:OFF_B1 + K * H1 * IN_CHANNELS, :H1 * C1] = c1b      # (192,128)

    # max-pool: fused row-select (d=0 rows then d=1 rows) + two lane selects
    slab[OFF_P1R:OFF_P1R + POOL * BATCH * H1P, :BATCH * H1] = (
        _maxpool_row_select_stacked(BATCH, H1, POOL))               # (32,32)
    p1s = _pool_lane_select(H1, C1, POOL)                            # (2,128,64)
    slab[OFF_P1S0:OFF_P1S0 + H1 * C1, :H1P * C1] = p1s[0]
    slab[OFF_P1S1:OFF_P1S1 + H1 * C1, :H1P * C1] = p1s[1]

    # conv2
    c2a = _conv_row_select(BATCH, H2, K, PAD)                        # (3,16,16)
    slab[OFF_A2_0:OFF_A2_0 + BATCH * H2, :BATCH * H2] = c2a[0]
    slab[OFF_A2_2:OFF_A2_2 + BATCH * H2, :BATCH * H2] = c2a[2]
    c2b = _conv_lane_matrix(c2w, H2, PAD).reshape(K * H2 * C1, H2 * C2)
    slab[OFF_B2:OFF_B2 + K * H2 * C1, :H2 * C2] = c2b                # (192,128)

    # avg pool (exactly linear): per-hp row blocks (16-aligned) + lane matrix
    p2r = _avgpool_row_blocks(BATCH, H2, POOL)                       # (4,2,16)
    for hp in range(H2P):
        slab[OFF_P2R + 16 * hp:OFF_P2R + 16 * hp + BATCH, :BATCH * H2] = p2r[hp]
    slab[OFF_P2S:OFF_P2S + H2 * C2, :H2P * C2] = _avgpool_lane_matrix(H2, C2, POOL)

    # fc1 with NCHW flatten folded in (4 blocks of (64,32)); fc2; fc3 (padded)
    g1 = _fc1_blocks(np.asarray(params['fc1_w'], np.float32)).reshape(
        H2P * H2P * C2, NEURONS)                                     # (256,32)
    slab[OFF_G1:OFF_G1 + H2P * H2P * C2, :NEURONS] = g1
    slab[OFF_W2:OFF_W2 + NEURONS, :NEURONS] = np.asarray(params['fc2_w'],
                                                         np.float32).T
    w3 = np.zeros((NEURONS, PADDED_OUT), np.float32)
    w3[:, :OUTPUT_SIZE] = np.asarray(params['fc3_w'], np.float32).T
    slab[OFF_W3:OFF_W3 + NEURONS, :] = w3

    # f32 bias slab: biases + padded-logit mask stay in full precision
    bias = np.zeros((BIAS_ROWS, PADDED_OUT), np.float32)
    bias[OFFB_B1, :NEURONS] = np.asarray(params['fc1_b'], np.float32)
    bias[OFFB_B2, :NEURONS] = np.asarray(params['fc2_b'], np.float32)
    bias[OFFB_B3, :] = -1e30                                          # mask padded logits
    bias[OFFB_B3, :OUTPUT_SIZE] = np.asarray(params['fc3_b'], np.float32)

    return dict(slab=jnp.asarray(slab, jnp.bfloat16),
                bias=jnp.asarray(bias, jnp.float32))


# =============================================================================
# The single fused Pallas kernel
# =============================================================================
def net_kernel(x_ref, slab_ref, bias_ref, o_ref):
    bf16 = jnp.bfloat16
    dot = functools.partial(jnp.dot, preferred_element_type=jnp.float32)

    # ---- conv block 1: 3x3 conv (pad 1) -> 2x2 max pool -> LeakyReLU -------
    x0 = x_ref[...]                                           # (32,64) f32, rows=(n,h)
    x0b = x0.astype(bf16)
    a1_0 = slab_ref[OFF_A1_0:OFF_A1_0 + BATCH * H1, 0:BATCH * H1]
    a1_2 = slab_ref[OFF_A1_2:OFF_A1_2 + BATCH * H1, 0:BATCH * H1]
    t0 = dot(a1_0, x0b)                                       # exact row shift (kh=0)
    t2 = dot(a1_2, x0b)                                       # exact row shift (kh=2)
    xcat = jnp.concatenate([t0, x0, t2], axis=1).astype(bf16)  # (32,192)
    y1 = dot(xcat, slab_ref[OFF_B1:OFF_B1 + K * H1 * IN_CHANNELS, :])  # (32,128)

    # fused max-pool row select: rows 0-15 = even h, rows 16-31 = odd h
    p1r = slab_ref[OFF_P1R:OFF_P1R + POOL * BATCH * H1P, 0:BATCH * H1]
    u = dot(p1r, y1.astype(bf16))                             # (32,128)
    hm = jnp.maximum(u[0:BATCH * H1P, :], u[BATCH * H1P:2 * BATCH * H1P, :])
    hmb = hm.astype(bf16)
    v0 = dot(hmb, slab_ref[OFF_P1S0:OFF_P1S0 + H1 * C1, 0:H1P * C1])
    v1 = dot(hmb, slab_ref[OFF_P1S1:OFF_P1S1 + H1 * C1, 0:H1P * C1])
    x1 = _leaky(jnp.maximum(v0, v1))                          # (16,64) f32

    # ---- conv block 2: 3x3 conv (pad 1) -> 2x2 avg pool -> LeakyReLU -------
    x1b = x1.astype(bf16)
    a2_0 = slab_ref[OFF_A2_0:OFF_A2_0 + BATCH * H2, 0:BATCH * H2]
    a2_2 = slab_ref[OFF_A2_2:OFF_A2_2 + BATCH * H2, 0:BATCH * H2]
    s0 = dot(a2_0, x1b)
    s2 = dot(a2_2, x1b)
    xcat2 = jnp.concatenate([s0, x1, s2], axis=1).astype(bf16)  # (16,192)
    y2 = dot(xcat2, slab_ref[OFF_B2:OFF_B2 + K * H2 * C1, :])    # (16,128) f32

    # avg pool (exactly linear): pool lanes once, then per-h row pool + fc1 fold
    yl = dot(y2.astype(bf16), slab_ref[OFF_P2S:OFF_P2S + H2 * C2, 0:H2P * C2])
    ylb = yl.astype(bf16)                                     # (16,64)
    acc = None
    for hp in range(H2P):
        r0 = OFF_P2R + 16 * hp
        z = dot(slab_ref[r0:r0 + BATCH, 0:BATCH * H2], ylb)   # (2,64) pooled rows for hp
        xz = _leaky(z).astype(bf16)
        g0 = OFF_G1 + H2P * C2 * hp
        c = dot(xz, slab_ref[g0:g0 + H2P * C2, 0:NEURONS])    # (2,32)
        acc = c if acc is None else acc + c

    # ---- MLP head (biases / activations / softmax in f32) -------------------
    b1 = bias_ref[OFFB_B1:OFFB_B1 + 1, 0:NEURONS]
    b2 = bias_ref[OFFB_B2:OFFB_B2 + 1, 0:NEURONS]
    b3 = bias_ref[OFFB_B3:OFFB_B3 + 1, :]                     # -1e30 in padded lanes
    h = _leaky(acc + b1)                                      # (2,32)
    h = _leaky(dot(h.astype(bf16),
                   slab_ref[OFF_W2:OFF_W2 + NEURONS, 0:NEURONS]) + b2)
    logits = dot(h.astype(bf16),
                 slab_ref[OFF_W3:OFF_W3 + NEURONS, :]) + b3   # (2,128)

    m = jnp.max(logits, axis=1, keepdims=True)
    e = jnp.exp(logits - m)                                   # padded lanes -> exactly 0
    denom = jnp.sum(e, axis=1, keepdims=True)
    o_ref[...] = (e / denom).astype(o_ref.dtype)              # EXACT normalization


def _fused_net(x0, kp):
    vmem = pl.BlockSpec(memory_space=pltpu.MemorySpace.VMEM)
    return pl.pallas_call(
        net_kernel,
        out_shape=jax.ShapeDtypeStruct((BATCH, PADDED_OUT), jnp.float32),
        in_specs=[vmem, vmem, vmem],
        out_specs=vmem,
        compiler_params=pltpu.CompilerParams(vmem_limit_bytes=32 * 1024 * 1024),
    )(x0, kp['slab'], kp['bias'])


def net_forward(x_nchw, kernel_params):
    # pack input: rows = (n, h), lanes = (w, cin)   -> (32, 64)
    # (kept host-side: two tiny XLA ops; batch scaling amortizes them further)
    x0 = jnp.transpose(x_nchw, (0, 2, 3, 1)).reshape(BATCH * IMG, IMG * IN_CHANNELS)
    out_padded = _fused_net(x0, kernel_params)
    return out_padded[:, :OUTPUT_SIZE]


# =============================================================================
# Pure-JAX reference (PyTorch semantics) for the correctness check
# =============================================================================
def net_reference(x_nchw, params):
    hi = jax.lax.Precision.HIGHEST
    x = jnp.transpose(x_nchw, (0, 2, 3, 1))
    for w_oihw, is_max in ((params['conv1_w'], True), (params['conv2_w'], False)):
        w_hwio = jnp.transpose(w_oihw, (2, 3, 1, 0))
        y = jax.lax.conv_general_dilated(
            x, w_hwio, window_strides=(1, 1), padding=[(PAD, PAD), (PAD, PAD)],
            dimension_numbers=('NHWC', 'HWIO', 'NHWC'), precision=hi)
        if is_max:
            y = jax.lax.reduce_window(y, -jnp.inf, jax.lax.max,
                                      (1, POOL, POOL, 1), (1, POOL, POOL, 1), 'VALID')
        else:
            y = jax.lax.reduce_window(y, 0.0, jax.lax.add,
                                      (1, POOL, POOL, 1), (1, POOL, POOL, 1),
                                      'VALID') / float(POOL * POOL)
        x = jnp.where(y > 0, y, NEG_SLOPE * y)
    x = jnp.transpose(x, (0, 3, 1, 2)).reshape(x.shape[0], -1)   # NCHW flatten
    h = jnp.dot(x, params['fc1_w'].T, precision=hi) + params['fc1_b']
    h = jnp.where(h > 0, h, NEG_SLOPE * h)
    h = jnp.dot(h, params['fc2_w'].T, precision=hi) + params['fc2_b']
    h = jnp.where(h > 0, h, NEG_SLOPE * h)
    logits = jnp.dot(h, params['fc3_w'].T, precision=hi) + params['fc3_b']
    return jax.nn.softmax(logits, axis=1)


def make_params(key):
    """PyTorch-layout parameters: conv OIHW, linear (out_features, in_features)."""
    ks = jax.random.split(key, 8)
    return dict(
        conv1_w=0.1 * jax.random.normal(ks[0], (C1, IN_CHANNELS, K, K), jnp.float32),
        conv2_w=0.1 * jax.random.normal(ks[1], (C2, C1, K, K), jnp.float32),
        fc1_w=0.1 * jax.random.normal(ks[2], (NEURONS, FLAT), jnp.float32),
        fc1_b=0.1 * jax.random.normal(ks[3], (NEURONS,), jnp.float32),
        fc2_w=0.1 * jax.random.normal(ks[4], (NEURONS, NEURONS), jnp.float32),
        fc2_b=0.1 * jax.random.normal(ks[5], (NEURONS,), jnp.float32),
        fc3_w=0.1 * jax.random.normal(ks[6], (OUTPUT_SIZE, NEURONS), jnp.float32),
        fc3_b=0.1 * jax.random.normal(ks[7], (OUTPUT_SIZE,), jnp.float32),
    )


# TODO(synk): batch_norm / layer_norm / weight_norm / dropout / prune are
# disabled in this module configuration, so they are intentionally not lowered.

if __name__ == "__main__":
    key = jax.random.PRNGKey(0)
    k_x, k_p = jax.random.split(key)
    x = jax.random.normal(k_x, (BATCH, IN_CHANNELS, IMG, IMG), jnp.float32)
    params = make_params(k_p)
    kparams = prepare_net(params)           # one-time host-side preprocessing

    fwd = jax.jit(net_forward)
    out = jax.block_until_ready(fwd(x, kparams))
    ref = jax.block_until_ready(net_reference(x, params))

    assert out.shape == (BATCH, OUTPUT_SIZE), out.shape
    np.testing.assert_allclose(np.asarray(out), np.asarray(ref),
                               rtol=5e-2, atol=5e-3)
    np.testing.assert_allclose(np.asarray(out).sum(axis=1), 1.0, atol=2e-3)
    print("KERNEL_OK")
</pallas_src>

<mosaic_0001>
module attributes {stable_mosaic.version = 11 : i64} {
  func.func @net_kernel(%arg0: memref<32x64xf32, #tpu.memory_space<vmem>>, %arg1: memref<1280x128xbf16, #tpu.memory_space<vmem>>, %arg2: memref<24x128xf32, #tpu.memory_space<vmem>>, %arg3: memref<2x128xf32, #tpu.memory_space<vmem>>) attributes {dimension_semantics = [], scalar_prefetch = 0 : i64, scratch_operands = 0 : i64, tpu.core_type = #tpu.core_type<tc>} {
    %c0 = arith.constant 0 : index
    %c0_0 = arith.constant 0 : index
    %0 = vector.load %arg0[%c0, %c0_0] : memref<32x64xf32, #tpu.memory_space<vmem>>, vector<32x64xf32>
    %1 = arith.truncf %0 : vector<32x64xf32> to vector<32x64xbf16>
    %c0_1 = arith.constant 0 : index
    %c0_2 = arith.constant 0 : index
    %2 = vector.load %arg1[%c0_1, %c0_2] : memref<1280x128xbf16, #tpu.memory_space<vmem>>, vector<32x32xbf16>
    %c32 = arith.constant 32 : index
    %c0_3 = arith.constant 0 : index
    %3 = vector.load %arg1[%c32, %c0_3] : memref<1280x128xbf16, #tpu.memory_space<vmem>>, vector<32x32xbf16>
    %cst = arith.constant dense<0.000000e+00> : vector<32x64xf32>
    %4 = tpu.matmul %2, %1, %cst {dimension_numbers = #tpu.dot_dimension_numbers<[1], [0], [0], [1], [0, 0, 1, 1], [], []>} : vector<32x32xbf16>, vector<32x64xbf16>, vector<32x64xf32> -> vector<32x64xf32>
    %cst_4 = arith.constant dense<0.000000e+00> : vector<32x64xf32>
    %5 = tpu.matmul %3, %1, %cst_4 {dimension_numbers = #tpu.dot_dimension_numbers<[1], [0], [0], [1], [0, 0, 1, 1], [], []>} : vector<32x32xbf16>, vector<32x64xbf16>, vector<32x64xf32> -> vector<32x64xf32>
    %6 = tpu.concatenate %4, %0, %5 in 1 : vector<32x64xf32>, vector<32x64xf32>, vector<32x64xf32> -> vector<32x192xf32>
    %7 = arith.truncf %6 : vector<32x192xf32> to vector<32x192xbf16>
    %c64 = arith.constant 64 : index
    %c0_5 = arith.constant 0 : index
    %8 = vector.load %arg1[%c64, %c0_5] : memref<1280x128xbf16, #tpu.memory_space<vmem>>, vector<192x128xbf16>
    %cst_6 = arith.constant dense<0.000000e+00> : vector<32x128xf32>
    %9 = tpu.matmul %7, %8, %cst_6 {dimension_numbers = #tpu.dot_dimension_numbers<[1], [0], [0], [1], [0, 0, 1, 1], [], []>} : vector<32x192xbf16>, vector<192x128xbf16>, vector<32x128xf32> -> vector<32x128xf32>
    %c256 = arith.constant 256 : index
    %c0_7 = arith.constant 0 : index
    %10 = vector.load %arg1[%c256, %c0_7] : memref<1280x128xbf16, #tpu.memory_space<vmem>>, vector<32x32xbf16>
    %11 = arith.truncf %9 : vector<32x128xf32> to vector<32x128xbf16>
    %cst_8 = arith.constant dense<0.000000e+00> : vector<32x128xf32>
    %12 = tpu.matmul %10, %11, %cst_8 {dimension_numbers = #tpu.dot_dimension_numbers<[1], [0], [0], [1], [0, 0, 1, 1], [], []>} : vector<32x32xbf16>, vector<32x128xbf16>, vector<32x128xf32> -> vector<32x128xf32>
    %13 = vector.extract_strided_slice %12 {offsets = [0, 0], sizes = [16, 128], strides = [1, 1]} : vector<32x128xf32> to vector<16x128xf32>
    %14 = vector.extract_strided_slice %12 {offsets = [16, 0], sizes = [16, 128], strides = [1, 1]} : vector<32x128xf32> to vector<16x128xf32>
    %15 = arith.maximumf %13, %14 : vector<16x128xf32>
    %16 = arith.truncf %15 : vector<16x128xf32> to vector<16x128xbf16>
    %c288 = arith.constant 288 : index
    %c0_9 = arith.constant 0 : index
    %17 = vector.load %arg1[%c288, %c0_9] : memref<1280x128xbf16, #tpu.memory_space<vmem>>, vector<128x64xbf16>
    %cst_10 = arith.constant dense<0.000000e+00> : vector<16x64xf32>
    %18 = tpu.matmul %16, %17, %cst_10 {dimension_numbers = #tpu.dot_dimension_numbers<[1], [0], [0], [1], [0, 0, 1, 1], [], []>} : vector<16x128xbf16>, vector<128x64xbf16>, vector<16x64xf32> -> vector<16x64xf32>
    %c416 = arith.constant 416 : index
    %c0_11 = arith.constant 0 : index
    %19 = vector.load %arg1[%c416, %c0_11] : memref<1280x128xbf16, #tpu.memory_space<vmem>>, vector<128x64xbf16>
    %cst_12 = arith.constant dense<0.000000e+00> : vector<16x64xf32>
    %20 = tpu.matmul %16, %19, %cst_12 {dimension_numbers = #tpu.dot_dimension_numbers<[1], [0], [0], [1], [0, 0, 1, 1], [], []>} : vector<16x128xbf16>, vector<128x64xbf16>, vector<16x64xf32> -> vector<16x64xf32>
    %21 = arith.maximumf %18, %20 : vector<16x64xf32>
    %cst_13 = arith.constant 0.000000e+00 : f32
    %22 = vector.broadcast %cst_13 : f32 to vector<16x64xf32>
    %23 = arith.cmpf ogt, %21, %22 : vector<16x64xf32>
    %cst_14 = arith.constant 0.00999999977 : f32
    %24 = vector.broadcast %cst_14 : f32 to vector<16x64xf32>
    %25 = arith.mulf %24, %21 : vector<16x64xf32>
    %26 = arith.select %23, %21, %25 : vector<16x64xi1>, vector<16x64xf32>
    %27 = arith.truncf %26 : vector<16x64xf32> to vector<16x64xbf16>
    %c544 = arith.constant 544 : index
    %c0_15 = arith.constant 0 : index
    %28 = vector.load %arg1[%c544, %c0_15] : memref<1280x128xbf16, #tpu.memory_space<vmem>>, vector<16x16xbf16>
    %c560 = arith.constant 560 : index
    %c0_16 = arith.constant 0 : index
    %29 = vector.load %arg1[%c560, %c0_16] : memref<1280x128xbf16, #tpu.memory_space<vmem>>, vector<16x16xbf16>
    %cst_17 = arith.constant dense<0.000000e+00> : vector<16x64xf32>
    %30 = tpu.matmul %28, %27, %cst_17 {dimension_numbers = #tpu.dot_dimension_numbers<[1], [0], [0], [1], [0, 0, 1, 1], [], []>} : vector<16x16xbf16>, vector<16x64xbf16>, vector<16x64xf32> -> vector<16x64xf32>
    %cst_18 = arith.constant dense<0.000000e+00> : vector<16x64xf32>
    %31 = tpu.matmul %29, %27, %cst_18 {dimension_numbers = #tpu.dot_dimension_numbers<[1], [0], [0], [1], [0, 0, 1, 1], [], []>} : vector<16x16xbf16>, vector<16x64xbf16>, vector<16x64xf32> -> vector<16x64xf32>
    %32 = tpu.concatenate %30, %26, %31 in 1 : vector<16x64xf32>, vector<16x64xf32>, vector<16x64xf32> -> vector<16x192xf32>
    %33 = arith.truncf %32 : vector<16x192xf32> to vector<16x192xbf16>
    %c576 = arith.constant 576 : index
    %c0_19 = arith.constant 0 : index
    %34 = vector.load %arg1[%c576, %c0_19] : memref<1280x128xbf16, #tpu.memory_space<vmem>>, vector<192x128xbf16>
    %cst_20 = arith.constant dense<0.000000e+00> : vector<16x128xf32>
    %35 = tpu.matmul %33, %34, %cst_20 {dimension_numbers = #tpu.dot_dimension_numbers<[1], [0], [0], [1], [0, 0, 1, 1], [], []>} : vector<16x192xbf16>, vector<192x128xbf16>, vector<16x128xf32> -> vector<16x128xf32>
    %36 = arith.truncf %35 : vector<16x128xf32> to vector<16x128xbf16>
    %c832 = arith.constant 832 : index
    %c0_21 = arith.constant 0 : index
    %37 = vector.load %arg1[%c832, %c0_21] : memref<1280x128xbf16, #tpu.memory_space<vmem>>, vector<128x64xbf16>
    %cst_22 = arith.constant dense<0.000000e+00> : vector<16x64xf32>
    %38 = tpu.matmul %36, %37, %cst_22 {dimension_numbers = #tpu.dot_dimension_numbers<[1], [0], [0], [1], [0, 0, 1, 1], [], []>} : vector<16x128xbf16>, vector<128x64xbf16>, vector<16x64xf32> -> vector<16x64xf32>
    %39 = arith.truncf %38 : vector<16x64xf32> to vector<16x64xbf16>
    %c768 = arith.constant 768 : index
    %c0_23 = arith.constant 0 : index
    %40 = vector.load %arg1[%c768, %c0_23] : memref<1280x128xbf16, #tpu.memory_space<vmem>>, vector<2x16xbf16>
    %cst_24 = arith.constant dense<0.000000e+00> : vector<2x64xf32>
    %41 = tpu.matmul %40, %39, %cst_24 {dimension_numbers = #tpu.dot_dimension_numbers<[1], [0], [0], [1], [0, 0, 1, 1], [], []>} : vector<2x16xbf16>, vector<16x64xbf16>, vector<2x64xf32> -> vector<2x64xf32>
    %cst_25 = arith.constant 0.000000e+00 : f32
    %42 = vector.broadcast %cst_25 : f32 to vector<2x64xf32>
    %43 = arith.cmpf ogt, %41, %42 : vector<2x64xf32>
    %cst_26 = arith.constant 0.00999999977 : f32
    %44 = vector.broadcast %cst_26 : f32 to vector<2x64xf32>
    %45 = arith.mulf %44, %41 : vector<2x64xf32>
    %46 = arith.select %43, %41, %45 : vector<2x64xi1>, vector<2x64xf32>
    %47 = arith.truncf %46 : vector<2x64xf32> to vector<2x64xbf16>
    %c960 = arith.constant 960 : index
    %c0_27 = arith.constant 0 : index
    %48 = vector.load %arg1[%c960, %c0_27] : memref<1280x128xbf16, #tpu.memory_space<vmem>>, vector<64x32xbf16>
    %cst_28 = arith.constant dense<0.000000e+00> : vector<2x32xf32>
    %49 = tpu.matmul %47, %48, %cst_28 {dimension_numbers = #tpu.dot_dimension_numbers<[1], [0], [0], [1], [0, 0, 1, 1], [], []>} : vector<2x64xbf16>, vector<64x32xbf16>, vector<2x32xf32> -> vector<2x32xf32>
    %c784 = arith.constant 784 : index
    %c0_29 = arith.constant 0 : index
    %50 = vector.load %arg1[%c784, %c0_29] : memref<1280x128xbf16, #tpu.memory_space<vmem>>, vector<2x16xbf16>
    %cst_30 = arith.constant dense<0.000000e+00> : vector<2x64xf32>
    %51 = tpu.matmul %50, %39, %cst_30 {dimension_numbers = #tpu.dot_dimension_numbers<[1], [0], [0], [1], [0, 0, 1, 1], [], []>} : vector<2x16xbf16>, vector<16x64xbf16>, vector<2x64xf32> -> vector<2x64xf32>
    %cst_31 = arith.constant 0.000000e+00 : f32
    %52 = vector.broadcast %cst_31 : f32 to vector<2x64xf32>
    %53 = arith.cmpf ogt, %51, %52 : vector<2x64xf32>
    %cst_32 = arith.constant 0.00999999977 : f32
    %54 = vector.broadcast %cst_32 : f32 to vector<2x64xf32>
    %55 = arith.mulf %54, %51 : vector<2x64xf32>
    %56 = arith.select %53, %51, %55 : vector<2x64xi1>, vector<2x64xf32>
    %57 = arith.truncf %56 : vector<2x64xf32> to vector<2x64xbf16>
    %c1024 = arith.constant 1024 : index
    %c0_33 = arith.constant 0 : index
    %58 = vector.load %arg1[%c1024, %c0_33] : memref<1280x128xbf16, #tpu.memory_space<vmem>>, vector<64x32xbf16>
    %cst_34 = arith.constant dense<0.000000e+00> : vector<2x32xf32>
    %59 = tpu.matmul %57, %58, %cst_34 {dimension_numbers = #tpu.dot_dimension_numbers<[1], [0], [0], [1], [0, 0, 1, 1], [], []>} : vector<2x64xbf16>, vector<64x32xbf16>, vector<2x32xf32> -> vector<2x32xf32>
    %60 = arith.addf %49, %59 : vector<2x32xf32>
    %c800 = arith.constant 800 : index
    %c0_35 = arith.constant 0 : index
    %61 = vector.load %arg1[%c800, %c0_35] : memref<1280x128xbf16, #tpu.memory_space<vmem>>, vector<2x16xbf16>
    %cst_36 = arith.constant dense<0.000000e+00> : vector<2x64xf32>
    %62 = tpu.matmul %61, %39, %cst_36 {dimension_numbers = #tpu.dot_dimension_numbers<[1], [0], [0], [1], [0, 0, 1, 1], [], []>} : vector<2x16xbf16>, vector<16x64xbf16>, vector<2x64xf32> -> vector<2x64xf32>
    %cst_37 = arith.constant 0.000000e+00 : f32
    %63 = vector.broadcast %cst_37 : f32 to vector<2x64xf32>
    %64 = arith.cmpf ogt, %62, %63 : vector<2x64xf32>
    %cst_38 = arith.constant 0.00999999977 : f32
    %65 = vector.broadcast %cst_38 : f32 to vector<2x64xf32>
    %66 = arith.mulf %65, %62 : vector<2x64xf32>
    %67 = arith.select %64, %62, %66 : vector<2x64xi1>, vector<2x64xf32>
    %68 = arith.truncf %67 : vector<2x64xf32> to vector<2x64xbf16>
    %c1088 = arith.constant 1088 : index
    %c0_39 = arith.constant 0 : index
    %69 = vector.load %arg1[%c1088, %c0_39] : memref<1280x128xbf16, #tpu.memory_space<vmem>>, vector<64x32xbf16>
    %cst_40 = arith.constant dense<0.000000e+00> : vector<2x32xf32>
    %70 = tpu.matmul %68, %69, %cst_40 {dimension_numbers = #tpu.dot_dimension_numbers<[1], [0], [0], [1], [0, 0, 1, 1], [], []>} : vector<2x64xbf16>, vector<64x32xbf16>, vector<2x32xf32> -> vector<2x32xf32>
    %71 = arith.addf %60, %70 : vector<2x32xf32>
    %c816 = arith.constant 816 : index
    %c0_41 = arith.constant 0 : index
    %72 = vector.load %arg1[%c816, %c0_41] : memref<1280x128xbf16, #tpu.memory_space<vmem>>, vector<2x16xbf16>
    %cst_42 = arith.constant dense<0.000000e+00> : vector<2x64xf32>
    %73 = tpu.matmul %72, %39, %cst_42 {dimension_numbers = #tpu.dot_dimension_numbers<[1], [0], [0], [1], [0, 0, 1, 1], [], []>} : vector<2x16xbf16>, vector<16x64xbf16>, vector<2x64xf32> -> vector<2x64xf32>
    %cst_43 = arith.constant 0.000000e+00 : f32
    %74 = vector.broadcast %cst_43 : f32 to vector<2x64xf32>
    %75 = arith.cmpf ogt, %73, %74 : vector<2x64xf32>
    %cst_44 = arith.constant 0.00999999977 : f32
    %76 = vector.broadcast %cst_44 : f32 to vector<2x64xf32>
    %77 = arith.mulf %76, %73 : vector<2x64xf32>
    %78 = arith.select %75, %73, %77 : vector<2x64xi1>, vector<2x64xf32>
    %79 = arith.truncf %78 : vector<2x64xf32> to vector<2x64xbf16>
    %c1152 = arith.constant 1152 : index
    %c0_45 = arith.constant 0 : index
    %80 = vector.load %arg1[%c1152, %c0_45] : memref<1280x128xbf16, #tpu.memory_space<vmem>>, vector<64x32xbf16>
    %cst_46 = arith.constant dense<0.000000e+00> : vector<2x32xf32>
    %81 = tpu.matmul %79, %80, %cst_46 {dimension_numbers = #tpu.dot_dimension_numbers<[1], [0], [0], [1], [0, 0, 1, 1], [], []>} : vector<2x64xbf16>, vector<64x32xbf16>, vector<2x32xf32> -> vector<2x32xf32>
    %82 = arith.addf %71, %81 : vector<2x32xf32>
    %c0_47 = arith.constant 0 : index
    %c0_48 = arith.constant 0 : index
    %83 = vector.load %arg2[%c0_47, %c0_48] : memref<24x128xf32, #tpu.memory_space<vmem>>, vector<1x32xf32>
    %c8 = arith.constant 8 : index
    %c0_49 = arith.constant 0 : index
    %84 = vector.load %arg2[%c8, %c0_49] : memref<24x128xf32, #tpu.memory_space<vmem>>, vector<1x32xf32>
    %c16 = arith.constant 16 : index
    %c0_50 = arith.constant 0 : index
    %85 = vector.load %arg2[%c16, %c0_50] : memref<24x128xf32, #tpu.memory_space<vmem>>, vector<1x128xf32>
    %86 = vector.broadcast %83 : vector<1x32xf32> to vector<2x32xf32>
    %87 = arith.addf %82, %86 : vector<2x32xf32>
    %cst_51 = arith.constant 0.000000e+00 : f32
    %88 = vector.broadcast %cst_51 : f32 to vector<2x32xf32>
    %89 = arith.cmpf ogt, %87, %88 : vector<2x32xf32>
    %cst_52 = arith.constant 0.00999999977 : f32
    %90 = vector.broadcast %cst_52 : f32 to vector<2x32xf32>
    %91 = arith.mulf %90, %87 : vector<2x32xf32>
    %92 = arith.select %89, %87, %91 : vector<2x32xi1>, vector<2x32xf32>
    %93 = arith.truncf %92 : vector<2x32xf32> to vector<2x32xbf16>
    %c1216 = arith.constant 1216 : index
    %c0_53 = arith.constant 0 : index
    %94 = vector.load %arg1[%c1216, %c0_53] : memref<1280x128xbf16, #tpu.memory_space<vmem>>, vector<32x32xbf16>
    %cst_54 = arith.constant dense<0.000000e+00> : vector<2x32xf32>
    %95 = tpu.matmul %93, %94, %cst_54 {dimension_numbers = #tpu.dot_dimension_numbers<[1], [0], [0], [1], [0, 0, 1, 1], [], []>} : vector<2x32xbf16>, vector<32x32xbf16>, vector<2x32xf32> -> vector<2x32xf32>
    %96 = vector.broadcast %84 : vector<1x32xf32> to vector<2x32xf32>
    %97 = arith.addf %95, %96 : vector<2x32xf32>
    %cst_55 = arith.constant 0.000000e+00 : f32
    %98 = vector.broadcast %cst_55 : f32 to vector<2x32xf32>
    %99 = arith.cmpf ogt, %97, %98 : vector<2x32xf32>
    %cst_56 = arith.constant 0.00999999977 : f32
    %100 = vector.broadcast %cst_56 : f32 to vector<2x32xf32>
    %101 = arith.mulf %100, %97 : vector<2x32xf32>
    %102 = arith.select %99, %97, %101 : vector<2x32xi1>, vector<2x32xf32>
    %103 = arith.truncf %102 : vector<2x32xf32> to vector<2x32xbf16>
    %c1248 = arith.constant 1248 : index
    %c0_57 = arith.constant 0 : index
    %104 = vector.load %arg1[%c1248, %c0_57] : memref<1280x128xbf16, #tpu.memory_space<vmem>>, vector<32x128xbf16>
    %cst_58 = arith.constant dense<0.000000e+00> : vector<2x128xf32>
    %105 = tpu.matmul %103, %104, %cst_58 {dimension_numbers = #tpu.dot_dimension_numbers<[1], [0], [0], [1], [0, 0, 1, 1], [], []>} : vector<2x32xbf16>, vector<32x128xbf16>, vector<2x128xf32> -> vector<2x128xf32>
    %106 = vector.broadcast %85 : vector<1x128xf32> to vector<2x128xf32>
    %107 = arith.addf %105, %106 : vector<2x128xf32>
    %cst_59 = arith.constant dense<0xFF800000> : vector<2xf32>
    %108 = vector.multi_reduction <maximumf>, %107, %cst_59 [1] : vector<2x128xf32> to vector<2xf32>
    %109 = vector.shape_cast %108 : vector<2xf32> to vector<2x1xf32>
    %110 = vector.broadcast %109 : vector<2x1xf32> to vector<2x128xf32>
    %111 = arith.subf %107, %110 : vector<2x128xf32>
    %112 = math.exp %111 : vector<2x128xf32>
    %cst_60 = arith.constant dense<0.000000e+00> : vector<2xf32>
    %113 = vector.multi_reduction <add>, %112, %cst_60 [1] : vector<2x128xf32> to vector<2xf32>
    %114 = vector.shape_cast %113 : vector<2xf32> to vector<2x1xf32>
    %115 = vector.broadcast %114 : vector<2x1xf32> to vector<2x128xf32>
    %116 = arith.divf %112, %115 : vector<2x128xf32>
    %c0_61 = arith.constant 0 : index
    %c0_62 = arith.constant 0 : index
    %117 = vector.load %arg3[%c0_61, %c0_62] : memref<2x128xf32, #tpu.memory_space<vmem>>, vector<2x128xf32>
    tpu.vector_store %arg3[%c0_61, %c0_62], %116 {strides = array<i32>} : memref<2x128xf32, #tpu.memory_space<vmem>>, vector<2x128xf32>,
    return
  }
}

</mosaic_0001>

<llo_original>
// kernel: net_forward.1
$region0: #{net_forward.1}
  #allocation0 [shape = 'u32[]', space=smem, size = 0x4, offset = 0x4, fixed_abs, tag = 'smem constant byte address 0x4 - core index']
  #allocation1 [shape = 'u32[144,128]{1,0:T(1,128)}', space=vmem, size = 0x12000, scoped, tag = 'internal scratch']
  %s0 = inlined_call_operand.vmem [shape: f32[32,64], index: 0, kind: input, shape index: {}]
  %s1 = inlined_call_operand.hbm [shape: bf16[1280,128], index: 1, kind: input, shape index: {}]
  %s2 = inlined_call_operand.vmem [shape: f32[24,128], index: 2, kind: input, shape index: {}]
  %s3 = inlined_call_operand.hbm [shape: f32[2,128], index: 3, kind: output, shape index: {}]
  %s4 = sld [smem:[#allocation0]]
  $region26: #{net_forward.1} parent=0
    _
  %s6 = ssub.s32 1, %s4
  %s7 = scalar_select 0, %s6, %s4
  $region1: #{net_forward.1} parent=0
    #allocation2 [shape = 'u8[327680]{0}', space=vmem, size = 0x50000, scoped, tag = 'input window, operand 1, single buffered']
    #allocation3 [shape = 's32[1]{0}', space=sflag, size = 0x4, scoped, tag = 'scoped memory for net_forward.1']
    #allocation4 [shape = 's32[1]{0}', space=sflag, size = 0x4, scoped, tag = 'scoped memory for net_forward.1']
    #allocation5 [shape = 'u8[1024]{0}', space=vmem, size = 0x400, scoped, tag = 'output window, operand 0, single buffered']
    %8 = vsyncpa [#allocation3], 0
    %9 = vsyncpa [#allocation4], 0
    // Predicated region
    $region2: #{net_forward.1} parent=1 // pred_check
      _
    $region3: #{net_forward.1} parent=1 // pred_check_branch
      %11 = sbr.rel (0) target = $region5
    $region4: #{net_forward.1} parent=1 // pred_region
      _
    $region5: #{net_forward.1} parent=1 // pred_fallthru
      _
    // Predicated region
    $region6: #{net_forward.1} parent=1 // pred_check
      _
    $region7: #{net_forward.1} parent=1 // pred_check_branch
      %13 = sbr.rel (0) target = $region9
    $region8: #{net_forward.1} parent=1 // pred_region
      %s15 = ssub.s32 10240, 10240
      %16 = vsyncadd [#allocation3], %s15
      %s17 = sshll.u32 [#allocation2], 4
      %s18 = int_to_ptr.vmem [resolvable:$true] %s17
      %23 = dma.hbm_to_vmem [thread:$0]  %s1, 10240, %s18, [#allocation3], 64, 64, 4
    $region9: #{net_forward.1} parent=1 // pred_fallthru
      _
    // Predicated region
    $region10: #{net_forward.1} parent=1 // pred_check
      _
    $region11: #{net_forward.1} parent=1 // pred_check_branch
      %25 = sbr.rel (0) target = $region13
    $region12: #{net_forward.1} parent=1 // pred_region
      _
    $region13: #{net_forward.1} parent=1 // pred_fallthru
      _
    // Predicated region
    $region14: #{net_forward.1} parent=1 // pred_check
      _
    $region15: #{net_forward.1} parent=1 // pred_check_branch
      %27 = sbr.rel (0) target = $region17
    $region16: #{net_forward.1} parent=1 // pred_region
      %28 = dma.done [#allocation3], 10240
    $region17: #{net_forward.1} parent=1 // pred_fallthru
      _
    %v30 = vld [vmem:[%s0] sm:$0xff]
    %v31 = vld [vmem:[%s0 + $0x8] sm:$0xff]
    %v32 = vld [vmem:[%s0 + $0x10] sm:$0xff]
    %v33 = vld [vmem:[%s0 + $0x18] sm:$0xff]
    %v34 = vpack.c.bf16 %v31, %v30
    %v35 = vpack.c.bf16 %v33, %v32
    %v36 = vld [vmem:[#allocation2] sm:$0xf]
    %v37 = vld [vmem:[#allocation2 + $0x4] sm:$0xf]
    %v38 = vld [vmem:[#allocation2 + $0x8] sm:$0xf]
    %v39 = vld [vmem:[#allocation2 + $0xc] sm:$0xf]
    %v40 = vld [vmem:[#allocation2 + $0x10] sm:$0xf]
    %v41 = vld [vmem:[#allocation2 + $0x14] sm:$0xf]
    %v42 = vld [vmem:[#allocation2 + $0x18] sm:$0xf]
    %v43 = vld [vmem:[#allocation2 + $0x1c] sm:$0xf]
    %v48 = vunpack.c.l.b16 %v36
    %v49 = vunpack.c.l.b16 %v37
    %v50 = vunpack.c.l.b16 %v38
    %v51 = vunpack.c.l.b16 %v39
    %v52 = vpack.c.b16 %v49, %v48
    %v53 = vpack.c.b16 %v51, %v50
    %vm54 = vcmask 261120
    %v56 = vsel %vm54, %v52, 0
    %v59 = vsel %vm54, %v53, 0
    %61 = vmatprep.subr.bf16.mxu0 0
    %62 = vmatpush1.bf16.msra.mxu0 %v34
    %63 = vmatprep.subr.bf16.mxu0 0
    %64 = vmatpush1.bf16.msra.mxu0 %v35
    %65 = vmatprep.subr.bf16.mxu0 0
    %66 = vmatpush1.bf16.msra.mxu0 0
    %67 = vmatprep.subr.bf16.mxu0 0
    %68 = vmatpush1.bf16.msra.mxu0 0
    %69 = vmatprep.subr.bf16.mxu0 0
    %70 = vmatpush1.bf16.msra.mxu0 0
    %71 = vmatprep.subr.bf16.mxu0 0
    %72 = vmatpush1.bf16.msra.mxu0 0
    %73 = vmatprep.subr.bf16.mxu0 0
    %74 = vmatpush1.bf16.msra.mxu0 0
    %75 = vmatprep.subr.bf16.mxu0 0
    %76 = vmatpush1.bf16.msra.mxu0 0
    %77 = vmatprep.subr.bf16.mxu0 0
    %78 = vmatpush1.bf16.msra.mxu0 0
    %79 = vmatprep.subr.bf16.mxu0 0
    %80 = vmatpush1.bf16.msra.mxu0 0
    %81 = vmatprep.subr.bf16.mxu0 0
    %82 = vmatpush1.bf16.msra.mxu0 0
    %83 = vmatprep.subr.bf16.mxu0 0
    %84 = vmatpush1.bf16.msra.mxu0 0
    %85 = vmatprep.subr.bf16.mxu0 0
    %86 = vmatpush1.bf16.msra.mxu0 0
    %87 = vmatprep.subr.bf16.mxu0 0
    %88 = vmatpush1.bf16.msra.mxu0 0
    %89 = vmatprep.subr.bf16.mxu0 0
    %90 = vmatpush1.bf16.msra.mxu0 0
    %91 = vmatprep.subr.bf16.mxu0 0
    %92 = vmatpush1.bf16.msra.mxu0 0
    %93 = vmatprep.mubr.bf16.mxu0 0
    %94 = vmatmul.mubr.bf16.gmra.mrb[0].mxu0 %v56
    %v95 = vpop.f32.mrb[0].mxu0
    %v96 = vadd.f32 0.0, %v95
    %v97 = vpop.f32.mrb[0].mxu0
    %v98 = vpop.f32.mrb[0].mxu0
    %v99 = vadd.f32 0.0, %v98
    %v100 = vpop.f32.mrb[0].mxu0
    %101 = vmatprep.mubr.bf16.mxu0 0
    %102 = vmatmul.mubr.bf16.gmra.mrb[0].mxu0 %v59
    %v103 = vpop.f32.mrb[0].mxu0
    %v104 = vadd.f32 0.0, %v103
    %v105 = vpop.f32.mrb[0].mxu0
    %v106 = vpop.f32.mrb[0].mxu0
    %v107 = vadd.f32 0.0, %v106
    %v108 = vpop.f32.mrb[0].mxu0
    %109 = vdwg.mxu0
    %v114 = vunpack.c.l.b16 %v40
    %v115 = vunpack.c.l.b16 %v41
    %v116 = vunpack.c.l.b16 %v42
    %v117 = vunpack.c.l.b16 %v43
    %v118 = vpack.c.b16 %v115, %v114
    %v119 = vpack.c.b16 %v117, %v116
    %v121 = vsel %vm54, %v118, 0
    %v124 = vsel %vm54, %v119, 0
    %126 = vmatprep.subr.bf16.mxu0 0
    %127 = vmatpush1.bf16.msra.mxu0 %v34
    %128 = vmatprep.subr.bf16.mxu0 0
    %129 = vmatpush1.bf16.msra.mxu0 %v35
    %130 = vmatprep.subr.bf16.mxu0 0
    %131 = vmatpush1.bf16.msra.mxu0 0
    %132 = vmatprep.subr.bf16.mxu0 0
    %133 = vmatpush1.bf16.msra.mxu0 0
    %134 = vmatprep.subr.bf16.mxu0 0
    %135 = vmatpush1.bf16.msra.mxu0 0
    %136 = vmatprep.subr.bf16.mxu0 0
    %137 = vmatpush1.bf16.msra.mxu0 0
    %138 = vmatprep.subr.bf16.mxu0 0
    %139 = vmatpush1.bf16.msra.mxu0 0
    %140 = vmatprep.subr.bf16.mxu0 0
    %141 = vmatpush1.bf16.msra.mxu0 0
    %142 = vmatprep.subr.bf16.mxu0 0
    %143 = vmatpush1.bf16.msra.mxu0 0
    %144 = vmatprep.subr.bf16.mxu0 0
    %145 = vmatpush1.bf16.msra.mxu0 0
    %146 = vmatprep.subr.bf16.mxu0 0
    %147 = vmatpush1.bf16.msra.mxu0 0
    %148 = vmatprep.subr.bf16.mxu0 0
    %149 = vmatpush1.bf16.msra.mxu0 0
    %150 = vmatprep.subr.bf16.mxu0 0
    %151 = vmatpush1.bf16.msra.mxu0 0
    %152 = vmatprep.subr.bf16.mxu0 0
    %153 = vmatpush1.bf16.msra.mxu0 0
    %154 = vmatprep.subr.bf16.mxu0 0
    %155 = vmatpush1.bf16.msra.mxu0 0
    %156 = vmatprep.subr.bf16.mxu0 0
    %157 = vmatpush1.bf16.msra.mxu0 0
    %158 = vmatprep.mubr.bf16.mxu0 0
    %159 = vmatmul.mubr.bf16.gmra.mrb[0].mxu0 %v121
    %v160 = vpop.f32.mrb[0].mxu0
    %v161 = vadd.f32 0.0, %v160
    %v162 = vpop.f32.mrb[0].mxu0
    %v163 = vpop.f32.mrb[0].mxu0
    %v164 = vadd.f32 0.0, %v163
    %v165 = vpop.f32.mrb[0].mxu0
    %166 = vmatprep.mubr.bf16.mxu0 0
    %167 = vmatmul.mubr.bf16.gmra.mrb[0].mxu0 %v124
    %v168 = vpop.f32.mrb[0].mxu0
    %v169 = vadd.f32 0.0, %v168
    %v170 = vpop.f32.mrb[0].mxu0
    %v171 = vpop.f32.mrb[0].mxu0
    %v172 = vadd.f32 0.0, %v171
    %v173 = vpop.f32.mrb[0].mxu0
    %174 = vdwg.mxu0
    %179 = vrot.lane.b32.xlu0 %v30, 64
    %v180 = vpop.permute.xlu0 %179
    %181 = vrot.lane.b32.xlu0 %v31, 64
    %v182 = vpop.permute.xlu0 %181
    %183 = vrot.lane.b32.xlu0 %v32, 64
    %v184 = vpop.permute.xlu0 %183
    %185 = vrot.lane.b32.xlu0 %v33, 64
    %v186 = vpop.permute.xlu0 %185
    %vm191 = vcmask 523264
    %v192 = vsel %vm191, %v96, %v180
    %v193 = vsel %vm191, %v99, %v182
    %v194 = vsel %vm191, %v104, %v184
    %v195 = vsel %vm191, %v107, %v186
    %v196 = vpack.c.bf16 %v193, %v192
    %v197 = vpack.c.bf16 %v164, %v161
    %v198 = vpack.c.bf16 %v195, %v194
    %v199 = vpack.c.bf16 %v172, %v169
    %v200 = vld [vmem:[#allocation2 + $0x20] sm:$0xf]
    %v201 = vld [vmem:[#allocation2 + $0x24] sm:$0xf]
    %v202 = vld [vmem:[#allocation2 + $0x28] sm:$0xf]
    %v203 = vld [vmem:[#allocation2 + $0x2c] sm:$0xf]
    %v204 = vld [vmem:[#allocation2 + $0x30] sm:$0xf]
    %v205 = vld [vmem:[#allocation2 + $0x34] sm:$0xf]
    %v206 = vld [vmem:[#allocation2 + $0x38] sm:$0xf]
    %v207 = vld [vmem:[#allocation2 + $0x3c] sm:$0xf]
    %v208 = vld [vmem:[#allocation2 + $0x40] sm:$0xf]
    %v209 = vld [vmem:[#allocation2 + $0x44] sm:$0xf]
    %v210 = vld [vmem:[#allocation2 + $0x48] sm:$0xf]
    %v211 = vld [vmem:[#allocation2 + $0x4c] sm:$0xf]
    %v212 = vld [vmem:[#allocation2 + $0x50] sm:$0xf]
    %v213 = vld [vmem:[#allocation2 + $0x54] sm:$0xf]
    %v214 = vld [vmem:[#allocation2 + $0x58] sm:$0xf]
    %v215 = vld [vmem:[#allocation2 + $0x5c] sm:$0xf]
    %v216 = vld [vmem:[#allocation2 + $0x60] sm:$0xf]
    %v217 = vld [vmem:[#allocation2 + $0x64] sm:$0xf]
    %v218 = vld [vmem:[#allocation2 + $0x68] sm:$0xf]
    %v219 = vld [vmem:[#allocation2 + $0x6c] sm:$0xf]
    %v220 = vld [vmem:[#allocation2 + $0x70] sm:$0xf]
    %v221 = vld [vmem:[#allocation2 + $0x74] sm:$0xf]
    %v222 = vld [vmem:[#allocation2 + $0x78] sm:$0xf]
    %v223 = vld [vmem:[#allocation2 + $0x7c] sm:$0xf]
    %v248 = vunpack.c.l.b16 %v200
    %v249 = vunpack.c.l.b16 %v201
    %v250 = vunpack.c.l.b16 %v202
    %v251 = vunpack.c.l.b16 %v203
    %v252 = vunpack.c.l.b16 %v204
    %v253 = vunpack.c.l.b16 %v205
    %v254 = vunpack.c.l.b16 %v206
    %v255 = vunpack.c.l.b16 %v207
    %v256 = vunpack.c.l.b16 %v208
    %v257 = vunpack.c.l.b16 %v209
    %v258 = vunpack.c.l.b16 %v210
    %v259 = vunpack.c.l.b16 %v211
    %v260 = vunpack.c.l.b16 %v212
    %v261 = vunpack.c.l.b16 %v213
    %v262 = vunpack.c.l.b16 %v214
    %v263 = vunpack.c.l.b16 %v215
    %v264 = vunpack.c.l.b16 %v216
    %v265 = vunpack.c.l.b16 %v217
    %v266 = vunpack.c.l.b16 %v218
    %v267 = vunpack.c.l.b16 %v219
    %v268 = vunpack.c.l.b16 %v220
    %v269 = vunpack.c.l.b16 %v221
    %v270 = vunpack.c.l.b16 %v222
    %v271 = vunpack.c.l.b16 %v223
    %v272 = vpack.c.b16 %v249, %v248
    %v273 = vpack.c.b16 %v251, %v250
    %v274 = vpack.c.b16 %v253, %v252
    %v275 = vpack.c.b16 %v255, %v254
    %v276 = vpack.c.b16 %v257, %v256
    %v277 = vpack.c.b16 %v259, %v258
    %v278 = vpack.c.b16 %v261, %v260
    %v279 = vpack.c.b16 %v263, %v262
    %v280 = vpack.c.b16 %v265, %v264
    %v281 = vpack.c.b16 %v267, %v266
    %v282 = vpack.c.b16 %v269, %v268
    %v283 = vpack.c.b16 %v271, %v270
    %v297 = vsel %vm191, %v197, 0
    %v300 = vsel %vm191, %v199, 0
    %302 = vmatprep.subr.bf16.mxu0 0
    %303 = vmatpush1.bf16.msra.mxu0 %v272
    %304 = vmatprep.subr.bf16.mxu0 0
    %305 = vmatpush1.bf16.msra.mxu0 %v273
    %306 = vmatprep.subr.bf16.mxu0 0
    %307 = vmatpush1.bf16.msra.mxu0 %v274
    %308 = vmatprep.subr.bf16.mxu0 0
    %309 = vmatpush1.bf16.msra.mxu0 %v275
    %310 = vmatprep.subr.bf16.mxu0 0
    %311 = vmatpush1.bf16.msra.mxu0 %v276
    %312 = vmatprep.subr.bf16.mxu0 0
    %313 = vmatpush1.bf16.msra.mxu0 %v277
    %314 = vmatprep.subr.bf16.mxu0 0
    %315 = vmatpush1.bf16.msra.mxu0 %v278
    %316 = vmatprep.subr.bf16.mxu0 0
    %317 = vmatpush1.bf16.msra.mxu0 %v279
    %318 = vmatprep.subr.bf16.mxu0 0
    %319 = vmatpush1.bf16.msra.mxu0 %v280
    %320 = vmatprep.subr.bf16.mxu0 0
    %321 = vmatpush1.bf16.msra.mxu0 %v281
    %322 = vmatprep.subr.bf16.mxu0 0
    %323 = vmatpush1.bf16.msra.mxu0 %v282
    %324 = vmatprep.subr.bf16.mxu0 0
    %325 = vmatpush1.bf16.msra.mxu0 %v283
    %326 = vmatprep.subr.bf16.mxu0 0
    %327 = vmatpush1.bf16.msra.mxu0 0
    %328 = vmatprep.subr.bf16.mxu0 0
    %329 = vmatpush1.bf16.msra.mxu0 0
    %330 = vmatprep.subr.bf16.mxu0 0
    %331 = vmatpush1.bf16.msra.mxu0 0
    %332 = vmatprep.subr.bf16.mxu0 0
    %333 = vmatpush1.bf16.msra.mxu0 0
    %334 = vmatprep.mubr.bf16.mxu0 %v297
    %335 = vmatmul.mubr.bf16.gmra.mrb[0].mxu0 %v196
    %v336 = vpop.f32.mrb[0].mxu0
    %v337 = vadd.f32 0.0, %v336
    %v338 = vpop.f32.mrb[0].mxu0
    %v339 = vpop.f32.mrb[0].mxu0
    %v340 = vadd.f32 0.0, %v339
    %v341 = vpop.f32.mrb[0].mxu0
    %342 = vmatprep.mubr.bf16.mxu0 %v300
    %343 = vmatmul.mubr.bf16.gmra.mrb[0].mxu0 %v198
    %v344 = vpop.f32.mrb[0].mxu0
    %v345 = vadd.f32 0.0, %v344
    %v346 = vpop.f32.mrb[0].mxu0
    %v347 = vpop.f32.mrb[0].mxu0
    %v348 = vadd.f32 0.0, %v347
    %v349 = vpop.f32.mrb[0].mxu0
    %350 = vdwg.mxu0
    %v351 = vld [vmem:[#allocation2 + $0x80] sm:$0xf]
    %v352 = vld [vmem:[#allocation2 + $0x84] sm:$0xf]
    %v353 = vld [vmem:[#allocation2 + $0x88] sm:$0xf]
    %v354 = vld [vmem:[#allocation2 + $0x8c] sm:$0xf]
    %v355 = vpack.c.bf16 %v340, %v337
    %v356 = vpack.c.bf16 %v348, %v345
    %v361 = vunpack.c.l.b16 %v351
    %v362 = vunpack.c.l.b16 %v352
    %v363 = vunpack.c.l.b16 %v353
    %v364 = vunpack.c.l.b16 %v354
    %v365 = vpack.c.b16 %v362, %v361
    %v366 = vpack.c.b16 %v364, %v363
    %v368 = vsel %vm54, %v365, 0
    %v371 = vsel %vm54, %v366, 0
    %373 = vmatprep.subr.bf16.mxu0 0
    %374 = vmatpush1.bf16.msra.mxu0 %v355
    %375 = vmatprep.subr.bf16.mxu0 0
    %376 = vmatpush1.bf16.msra.mxu0 %v356
    %377 = vmatprep.subr.bf16.mxu0 0
    %378 = vmatpush1.bf16.msra.mxu0 0
    %379 = vmatprep.subr.bf16.mxu0 0
    %380 = vmatpush1.bf16.msra.mxu0 0
    %381 = vmatprep.subr.bf16.mxu0 0
    %382 = vmatpush1.bf16.msra.mxu0 0
    %383 = vmatprep.subr.bf16.mxu0 0
    %384 = vmatpush1.bf16.msra.mxu0 0
    %385 = vmatprep.subr.bf16.mxu0 0
    %386 = vmatpush1.bf16.msra.mxu0 0
    %387 = vmatprep.subr.bf16.mxu0 0
    %388 = vmatpush1.bf16.msra.mxu0 0
    %389 = vmatprep.subr.bf16.mxu0 0
    %390 = vmatpush1.bf16.msra.mxu0 0
    %391 = vmatprep.subr.bf16.mxu0 0
    %392 = vmatpush1.bf16.msra.mxu0 0
    %393 = vmatprep.subr.bf16.mxu0 0
    %394 = vmatpush1.bf16.msra.mxu0 0
    %395 = vmatprep.subr.bf16.mxu0 0
    %396 = vmatpush1.bf16.msra.mxu0 0
    %397 = vmatprep.subr.bf16.mxu0 0
    %398 = vmatpush1.bf16.msra.mxu0 0
    %399 = vmatprep.subr.bf16.mxu0 0
    %400 = vmatpush1.bf16.msra.mxu0 0
    %401 = vmatprep.subr.bf16.mxu0 0
    %402 = vmatpush1.bf16.msra.mxu0 0
    %403 = vmatprep.subr.bf16.mxu0 0
    %404 = vmatpush1.bf16.msra.mxu0 0
    %405 = vmatprep.mubr.bf16.mxu0 0
    %406 = vmatmul.mubr.bf16.gmra.mrb[0].mxu0 %v368
    %v407 = vpop.f32.mrb[0].mxu0
    %v408 = vadd.f32 0.0, %v407
    %v409 = vpop.f32.mrb[0].mxu0
    %v410 = vpop.f32.mrb[0].mxu0
    %v411 = vadd.f32 0.0, %v410
    %v412 = vpop.f32.mrb[0].mxu0
    %413 = vmatprep.mubr.bf16.mxu0 0
    %414 = vmatmul.mubr.bf16.gmra.mrb[0].mxu0 %v371
    %v415 = vpop.f32.mrb[0].mxu0
    %v416 = vadd.f32 0.0, %v415
    %v417 = vpop.f32.mrb[0].mxu0
    %v418 = vpop.f32.mrb[0].mxu0
    %v419 = vadd.f32 0.0, %v418
    %v420 = vpop.f32.mrb[0].mxu0
    %421 = vdwg.mxu0
    %v422 = vmax.f32 %v408, %v416
    %v423 = vmax.f32 %v411, %v419
    %v424 = vpack.c.bf16 %v423, %v422
    %v425 = vld [vmem:[#allocation2 + $0x90] sm:$0xf]
    %v426 = vld [vmem:[#allocation2 + $0x94] sm:$0xf]
    %v427 = vld [vmem:[#allocation2 + $0x98] sm:$0xf]
    %v428 = vld [vmem:[#allocation2 + $0x9c] sm:$0xf]
    %v429 = vld [vmem:[#allocation2 + $0xa0] sm:$0xf]
    %v430 = vld [vmem:[#allocation2 + $0xa4] sm:$0xf]
    %v431 = vld [vmem:[#allocation2 + $0xa8] sm:$0xf]
    %v432 = vld [vmem:[#allocation2 + $0xac] sm:$0xf]
    %v433 = vld [vmem:[#allocation2 + $0xb0] sm:$0xf]
    %v434 = vld [vmem:[#allocation2 + $0xb4] sm:$0xf]
    %v435 = vld [vmem:[#allocation2 + $0xb8] sm:$0xf]
    %v436 = vld [vmem:[#allocation2 + $0xbc] sm:$0xf]
    %v437 = vld [vmem:[#allocation2 + $0xc0] sm:$0xf]
    %v438 = vld [vmem:[#allocation2 + $0xc4] sm:$0xf]
    %v439 = vld [vmem:[#allocation2 + $0xc8] sm:$0xf]
    %v440 = vld [vmem:[#allocation2 + $0xcc] sm:$0xf]
    %v457 = vunpack.c.l.b16 %v425
    %v458 = vunpack.c.l.b16 %v426
    %v459 = vunpack.c.l.b16 %v427
    %v460 = vunpack.c.l.b16 %v428
    %v461 = vunpack.c.l.b16 %v429
    %v462 = vunpack.c.l.b16 %v430
    %v463 = vunpack.c.l.b16 %v431
    %v464 = vunpack.c.l.b16 %v432
    %v465 = vunpack.c.l.b16 %v433
    %v466 = vunpack.c.l.b16 %v434
    %v467 = vunpack.c.l.b16 %v435
    %v468 = vunpack.c.l.b16 %v436
    %v469 = vunpack.c.l.b16 %v437
    %v470 = vunpack.c.l.b16 %v438
    %v471 = vunpack.c.l.b16 %v439
    %v472 = vunpack.c.l.b16 %v440
    %v473 = vpack.c.b16 %v458, %v457
    %v474 = vpack.c.b16 %v460, %v459
    %v475 = vpack.c.b16 %v462, %v461
    %v476 = vpack.c.b16 %v464, %v463
    %v477 = vpack.c.b16 %v466, %v465
    %v478 = vpack.c.b16 %v468, %v467
    %v479 = vpack.c.b16 %v470, %v469
    %v480 = vpack.c.b16 %v472, %v471
    %489 = vmatprep.subr.bf16.mxu0 0
    %490 = vmatpush1.bf16.msra.mxu0 %v473
    %491 = vmatprep.subr.bf16.mxu0 0
    %492 = vmatpush1.bf16.msra.mxu0 %v474
    %493 = vmatprep.subr.bf16.mxu0 0
    %494 = vmatpush1.bf16.msra.mxu0 %v475
    %495 = vmatprep.subr.bf16.mxu0 0
    %496 = vmatpush1.bf16.msra.mxu0 %v476
    %497 = vmatprep.subr.bf16.mxu0 0
    %498 = vmatpush1.bf16.msra.mxu0 %v477
    %499 = vmatprep.subr.bf16.mxu0 0
    %500 = vmatpush1.bf16.msra.mxu0 %v478
    %501 = vmatprep.subr.bf16.mxu0 0
    %502 = vmatpush1.bf16.msra.mxu0 %v479
    %503 = vmatprep.subr.bf16.mxu0 0
    %504 = vmatpush1.bf16.msra.mxu0 %v480
    %505 = vmatprep.subr.bf16.mxu0 0
    %506 = vmatpush1.bf16.msra.mxu0 0
    %507 = vmatprep.subr.bf16.mxu0 0
    %508 = vmatpush1.bf16.msra.mxu0 0
    %509 = vmatprep.subr.bf16.mxu0 0
    %510 = vmatpush1.bf16.msra.mxu0 0
    %511 = vmatprep.subr.bf16.mxu0 0
    %512 = vmatpush1.bf16.msra.mxu0 0
    %513 = vmatprep.subr.bf16.mxu0 0
    %514 = vmatpush1.bf16.msra.mxu0 0
    %515 = vmatprep.subr.bf16.mxu0 0
    %516 = vmatpush1.bf16.msra.mxu0 0
    %517 = vmatprep.subr.bf16.mxu0 0
    %518 = vmatpush1.bf16.msra.mxu0 0
    %519 = vmatprep.subr.bf16.mxu0 0
    %520 = vmatpush1.bf16.msra.mxu0 0
    %521 = vmatprep.mubr.bf16.mxu0 0
    %522 = vmatmul.mubr.bf16.gmra.mrb[0].mxu0 %v424
    %v523 = vpop.f32.mrb[0].mxu0
    %v524 = vadd.f32 0.0, %v523
    %v525 = vpop.f32.mrb[0].mxu0
    %v526 = vpop.f32.mrb[0].mxu0
    %v527 = vadd.f32 0.0, %v526
    %v528 = vpop.f32.mrb[0].mxu0
    %529 = vdwg.mxu0
    %v530 = vld [vmem:[#allocation2 + $0xd0] sm:$0xf]
    %v531 = vld [vmem:[#allocation2 + $0xd4] sm:$0xf]
    %v532 = vld [vmem:[#allocation2 + $0xd8] sm:$0xf]
    %v533 = vld [vmem:[#allocation2 + $0xdc] sm:$0xf]
    %v534 = vld [vmem:[#allocation2 + $0xe0] sm:$0xf]
    %v535 = vld [vmem:[#allocation2 + $0xe4] sm:$0xf]
    %v536 = vld [vmem:[#allocation2 + $0xe8] sm:$0xf]
    %v537 = vld [vmem:[#allocation2 + $0xec] sm:$0xf]
    %v538 = vld [vmem:[#allocation2 + $0xf0] sm:$0xf]
    %v539 = vld [vmem:[#allocation2 + $0xf4] sm:$0xf]
    %v540 = vld [vmem:[#allocation2 + $0xf8] sm:$0xf]
    %v541 = vld [vmem:[#allocation2 + $0xfc] sm:$0xf]
    %v542 = vld [vmem:[#allocation2 + $0x100] sm:$0xf]
    %v543 = vld [vmem:[#allocation2 + $0x104] sm:$0xf]
    %v544 = vld [vmem:[#allocation2 + $0x108] sm:$0xf]
    %v545 = vld [vmem:[#allocation2 + $0x10c] sm:$0xf]
    %v562 = vunpack.c.l.b16 %v530
    %v563 = vunpack.c.l.b16 %v531
    %v564 = vunpack.c.l.b16 %v532
    %v565 = vunpack.c.l.b16 %v533
    %v566 = vunpack.c.l.b16 %v534
    %v567 = vunpack.c.l.b16 %v535
    %v568 = vunpack.c.l.b16 %v536
    %v569 = vunpack.c.l.b16 %v537
    %v570 = vunpack.c.l.b16 %v538
    %v571 = vunpack.c.l.b16 %v539
    %v572 = vunpack.c.l.b16 %v540
    %v573 = vunpack.c.l.b16 %v541
    %v574 = vunpack.c.l.b16 %v542
    %v575 = vunpack.c.l.b16 %v543
    %v576 = vunpack.c.l.b16 %v544
    %v577 = vunpack.c.l.b16 %v545
    %v578 = vpack.c.b16 %v563, %v562
    %v579 = vpack.c.b16 %v565, %v564
    %v580 = vpack.c.b16 %v567, %v566
    %v581 = vpack.c.b16 %v569, %v568
    %v582 = vpack.c.b16 %v571, %v570
    %v583 = vpack.c.b16 %v573, %v572
    %v584 = vpack.c.b16 %v575, %v574
    %v585 = vpack.c.b16 %v577, %v576
    %594 = vmatprep.subr.bf16.mxu0 0
    %595 = vmatpush1.bf16.msra.mxu0 %v578
    %596 = vmatprep.subr.bf16.mxu0 0
    %597 = vmatpush1.bf16.msra.mxu0 %v579
    %598 = vmatprep.subr.bf16.mxu0 0
    %599 = vmatpush1.bf16.msra.mxu0 %v580
    %600 = vmatprep.subr.bf16.mxu0 0
    %601 = vmatpush1.bf16.msra.mxu0 %v581
    %602 = vmatprep.subr.bf16.mxu0 0
    %603 = vmatpush1.bf16.msra.mxu0 %v582
    %604 = vmatprep.subr.bf16.mxu0 0
    %605 = vmatpush1.bf16.msra.mxu0 %v583
    %606 = vmatprep.subr.bf16.mxu0 0
    %607 = vmatpush1.bf16.msra.mxu0 %v584
    %608 = vmatprep.subr.bf16.mxu0 0
    %609 = vmatpush1.bf16.msra.mxu0 %v585
    %610 = vmatprep.subr.bf16.mxu0 0
    %611 = vmatpush1.bf16.msra.mxu0 0
    %612 = vmatprep.subr.bf16.mxu0 0
    %613 = vmatpush1.bf16.msra.mxu0 0
    %614 = vmatprep.subr.bf16.mxu0 0
    %615 = vmatpush1.bf16.msra.mxu0 0
    %616 = vmatprep.subr.bf16.mxu0 0
    %617 = vmatpush1.bf16.msra.mxu0 0
    %618 = vmatprep.subr.bf16.mxu0 0
    %619 = vmatpush1.bf16.msra.mxu0 0
    %620 = vmatprep.subr.bf16.mxu0 0
    %621 = vmatpush1.bf16.msra.mxu0 0
    %622 = vmatprep.subr.bf16.mxu0 0
    %623 = vmatpush1.bf16.msra.mxu0 0
    %624 = vmatprep.subr.bf16.mxu0 0
    %625 = vmatpush1.bf16.msra.mxu0 0
    %626 = vmatprep.mubr.bf16.mxu0 0
    %627 = vmatmul.mubr.bf16.gmra.mrb[0].mxu0 %v424
    %v628 = vpop.f32.mrb[0].mxu0
    %v629 = vadd.f32 0.0, %v628
    %v630 = vpop.f32.mrb[0].mxu0
    %v631 = vpop.f32.mrb[0].mxu0
    %v632 = vadd.f32 0.0, %v631
    %v633 = vpop.f32.mrb[0].mxu0
    %634 = vdwg.mxu0
    %v635 = vmax.f32 %v524, %v629
    %v636 = vmax.f32 %v527, %v632
    %vm637 = vcmp.gt.f32.partialorder %v635, 0.0
    %vm638 = vcmp.gt.f32.partialorder %v636, 0.0
    %v639 = vmul.f32 %v635, 0.01
    %v640 = vmul.f32 %v636, 0.01
    %v641 = vsel %vm637, %v635, %v639
    %v642 = vsel %vm638, %v636, %v640
    %v643 = vpack.c.bf16 %v642, %v641
    %v644 = vld [vmem:[#allocation2 + $0x110] sm:$0xf]
    %v645 = vld [vmem:[#allocation2 + $0x114] sm:$0xf]
    %v646 = vld [vmem:[#allocation2 + $0x118] sm:$0xf]
    %v647 = vld [vmem:[#allocation2 + $0x11c] sm:$0xf]
    %v650 = vunpack.c.l.b16 %v644
    %v651 = vunpack.c.l.b16 %v645
    %v652 = vpack.c.b16 %v651, %v650
    %vm653 = vcmask 130048
    %v655 = vsel %vm653, %v652, 0
    %657 = vmatprep.subr.bf16.mxu0 0
    %658 = vmatpush1.bf16.msra.mxu0 %v643
    %659 = vmatprep.subr.bf16.mxu0 0
    %660 = vmatpush1.bf16.msra.mxu0 0
    %661 = vmatprep.subr.bf16.mxu0 0
    %662 = vmatpush1.bf16.msra.mxu0 0
    %663 = vmatprep.subr.bf16.mxu0 0
    %664 = vmatpush1.bf16.msra.mxu0 0
    %665 = vmatprep.subr.bf16.mxu0 0
    %666 = vmatpush1.bf16.msra.mxu0 0
    %667 = vmatprep.subr.bf16.mxu0 0
    %668 = vmatpush1.bf16.msra.mxu0 0
    %669 = vmatprep.subr.bf16.mxu0 0
    %670 = vmatpush1.bf16.msra.mxu0 0
    %671 = vmatprep.subr.bf16.mxu0 0
    %672 = vmatpush1.bf16.msra.mxu0 0
    %673 = vmatprep.subr.bf16.mxu0 0
    %674 = vmatpush1.bf16.msra.mxu0 0
    %675 = vmatprep.subr.bf16.mxu0 0
    %676 = vmatpush1.bf16.msra.mxu0 0
    %677 = vmatprep.subr.bf16.mxu0 0
    %678 = vmatpush1.bf16.msra.mxu0 0
    %679 = vmatprep.subr.bf16.mxu0 0
    %680 = vmatpush1.bf16.msra.mxu0 0
    %681 = vmatprep.subr.bf16.mxu0 0
    %682 = vmatpush1.bf16.msra.mxu0 0
    %683 = vmatprep.subr.bf16.mxu0 0
    %684 = vmatpush1.bf16.msra.mxu0 0
    %685 = vmatprep.subr.bf16.mxu0 0
    %686 = vmatpush1.bf16.msra.mxu0 0
    %687 = vmatprep.subr.bf16.mxu0 0
    %688 = vmatpush1.bf16.msra.mxu0 0
    %689 = vmatprep.mubr.bf16.mxu0 0
    %690 = vmatmul.mubr.bf16.gmra.mrb[0].mxu0 %v655
    %v691 = vpop.f32.mrb[0].mxu0
    %v692 = vadd.f32 0.0, %v691
    %v693 = vpop.f32.mrb[0].mxu0
    %v694 = vpop.f32.mrb[0].mxu0
    %v695 = vadd.f32 0.0, %v694
    %v696 = vpop.f32.mrb[0].mxu0
    %697 = vdwg.mxu0
    %v700 = vunpack.c.l.b16 %v646
    %v701 = vunpack.c.l.b16 %v647
    %v702 = vpack.c.b16 %v701, %v700
    %v704 = vsel %vm653, %v702, 0
    %706 = vmatprep.subr.bf16.mxu0 0
    %707 = vmatpush1.bf16.msra.mxu0 %v643
    %708 = vmatprep.subr.bf16.mxu0 0
    %709 = vmatpush1.bf16.msra.mxu0 0
    %710 = vmatprep.subr.bf16.mxu0 0
    %711 = vmatpush1.bf16.msra.mxu0 0
    %712 = vmatprep.subr.bf16.mxu0 0
    %713 = vmatpush1.bf16.msra.mxu0 0
    %714 = vmatprep.subr.bf16.mxu0 0
    %715 = vmatpush1.bf16.msra.mxu0 0
    %716 = vmatprep.subr.bf16.mxu0 0
    %717 = vmatpush1.bf16.msra.mxu0 0
    %718 = vmatprep.subr.bf16.mxu0 0
    %719 = vmatpush1.bf16.msra.mxu0 0
    %720 = vmatprep.subr.bf16.mxu0 0
    %721 = vmatpush1.bf16.msra.mxu0 0
    %722 = vmatprep.subr.bf16.mxu0 0
    %723 = vmatpush1.bf16.msra.mxu0 0
    %724 = vmatprep.subr.bf16.mxu0 0
    %725 = vmatpush1.bf16.msra.mxu0 0
    %726 = vmatprep.subr.bf16.mxu0 0
    %727 = vmatpush1.bf16.msra.mxu0 0
    %728 = vmatprep.subr.bf16.mxu0 0
    %729 = vmatpush1.bf16.msra.mxu0 0
    %730 = vmatprep.subr.bf16.mxu0 0
    %731 = vmatpush1.bf16.msra.mxu0 0
    %732 = vmatprep.subr.bf16.mxu0 0
    %733 = vmatpush1.bf16.msra.mxu0 0
    %734 = vmatprep.subr.bf16.mxu0 0
    %735 = vmatpush1.bf16.msra.mxu0 0
    %736 = vmatprep.subr.bf16.mxu0 0
    %737 = vmatpush1.bf16.msra.mxu0 0
    %738 = vmatprep.mubr.bf16.mxu0 0
    %739 = vmatmul.mubr.bf16.gmra.mrb[0].mxu0 %v704
    %v740 = vpop.f32.mrb[0].mxu0
    %v741 = vadd.f32 0.0, %v740
    %v742 = vpop.f32.mrb[0].mxu0
    %v743 = vpop.f32.mrb[0].mxu0
    %v744 = vadd.f32 0.0, %v743
    %v745 = vpop.f32.mrb[0].mxu0
    %746 = vdwg.mxu0
    %749 = vrot.lane.b32.xlu0 %v641, 64
    %v750 = vpop.permute.xlu0 %749
    %751 = vrot.lane.b32.xlu0 %v642, 64
    %v752 = vpop.permute.xlu0 %751
    %v755 = vsel %vm191, %v692, %v750
    %v756 = vsel %vm191, %v695, %v752
    %v757 = vpack.c.bf16 %v756, %v755
    %v758 = vpack.c.bf16 %v744, %v741
    %v759 = vld [vmem:[#allocation2 + $0x120] sm:$0xf]
    %v760 = vld [vmem:[#allocation2 + $0x124] sm:$0xf]
    %v761 = vld [vmem:[#allocation2 + $0x128] sm:$0xf]
    %v762 = vld [vmem:[#allocation2 + $0x12c] sm:$0xf]
    %v763 = vld [vmem:[#allocation2 + $0x130] sm:$0xf]
    %v764 = vld [vmem:[#allocation2 + $0x134] sm:$0xf]
    %v765 = vld [vmem:[#allocation2 + $0x138] sm:$0xf]
    %v766 = vld [vmem:[#allocation2 + $0x13c] sm:$0xf]
    %v767 = vld [vmem:[#allocation2 + $0x140] sm:$0xf]
    %v768 = vld [vmem:[#allocation2 + $0x144] sm:$0xf]
    %v769 = vld [vmem:[#allocation2 + $0x148] sm:$0xf]
    %v770 = vld [vmem:[#allocation2 + $0x14c] sm:$0xf]
    %v771 = vld [vmem:[#allocation2 + $0x150] sm:$0xf]
    %v772 = vld [vmem:[#allocation2 + $0x154] sm:$0xf]
    %v773 = vld [vmem:[#allocation2 + $0x158] sm:$0xf]
    %v774 = vld [vmem:[#allocation2 + $0x15c] sm:$0xf]
    %v775 = vld [vmem:[#allocation2 + $0x160] sm:$0xf]
    %v776 = vld [vmem:[#allocation2 + $0x164] sm:$0xf]
    %v777 = vld [vmem:[#allocation2 + $0x168] sm:$0xf]
    %v778 = vld [vmem:[#allocation2 + $0x16c] sm:$0xf]
    %v779 = vld [vmem:[#allocation2 + $0x170] sm:$0xf]
    %v780 = vld [vmem:[#allocation2 + $0x174] sm:$0xf]
    %v781 = vld [vmem:[#allocation2 + $0x178] sm:$0xf]
    %v782 = vld [vmem:[#allocation2 + $0x17c] sm:$0xf]
    %v807 = vunpack.c.l.b16 %v759
    %v808 = vunpack.c.l.b16 %v760
    %v809 = vunpack.c.l.b16 %v761
    %v810 = vunpack.c.l.b16 %v762
    %v811 = vunpack.c.l.b16 %v763
    %v812 = vunpack.c.l.b16 %v764
    %v813 = vunpack.c.l.b16 %v765
    %v814 = vunpack.c.l.b16 %v766
    %v815 = vunpack.c.l.b16 %v767
    %v816 = vunpack.c.l.b16 %v768
    %v817 = vunpack.c.l.b16 %v769
    %v818 = vunpack.c.l.b16 %v770
    %v819 = vunpack.c.l.b16 %v771
    %v820 = vunpack.c.l.b16 %v772
    %v821 = vunpack.c.l.b16 %v773
    %v822 = vunpack.c.l.b16 %v774
    %v823 = vunpack.c.l.b16 %v775
    %v824 = vunpack.c.l.b16 %v776
    %v825 = vunpack.c.l.b16 %v777
    %v826 = vunpack.c.l.b16 %v778
    %v827 = vunpack.c.l.b16 %v779
    %v828 = vunpack.c.l.b16 %v780
    %v829 = vunpack.c.l.b16 %v781
    %v830 = vunpack.c.l.b16 %v782
    %v831 = vpack.c.b16 %v808, %v807
    %v832 = vpack.c.b16 %v810, %v809
    %v833 = vpack.c.b16 %v812, %v811
    %v834 = vpack.c.b16 %v814, %v813
    %v835 = vpack.c.b16 %v816, %v815
    %v836 = vpack.c.b16 %v818, %v817
    %v837 = vpack.c.b16 %v820, %v819
    %v838 = vpack.c.b16 %v822, %v821
    %v839 = vpack.c.b16 %v824, %v823
    %v840 = vpack.c.b16 %v826, %v825
    %v841 = vpack.c.b16 %v828, %v827
    %v842 = vpack.c.b16 %v830, %v829
    %v856 = vsel %vm191, %v758, 0
    %858 = vmatprep.subr.bf16.mxu0 0
    %859 = vmatpush1.bf16.msra.mxu0 %v831
    %860 = vmatprep.subr.bf16.mxu0 0
    %861 = vmatpush1.bf16.msra.mxu0 %v832
    %862 = vmatprep.subr.bf16.mxu0 0
    %863 = vmatpush1.bf16.msra.mxu0 %v833
    %864 = vmatprep.subr.bf16.mxu0 0
    %865 = vmatpush1.bf16.msra.mxu0 %v834
    %866 = vmatprep.subr.bf16.mxu0 0
    %867 = vmatpush1.bf16.msra.mxu0 %v835
    %868 = vmatprep.subr.bf16.mxu0 0
    %869 = vmatpush1.bf16.msra.mxu0 %v836
    %870 = vmatprep.subr.bf16.mxu0 0
    %871 = vmatpush1.bf16.msra.mxu0 %v837
    %872 = vmatprep.subr.bf16.mxu0 0
    %873 = vmatpush1.bf16.msra.mxu0 %v838
    %874 = vmatprep.subr.bf16.mxu0 0
    %875 = vmatpush1.bf16.msra.mxu0 %v839
    %876 = vmatprep.subr.bf16.mxu0 0
    %877 = vmatpush1.bf16.msra.mxu0 %v840
    %878 = vmatprep.subr.bf16.mxu0 0
    %879 = vmatpush1.bf16.msra.mxu0 %v841
    %880 = vmatprep.subr.bf16.mxu0 0
    %881 = vmatpush1.bf16.msra.mxu0 %v842
    %882 = vmatprep.subr.bf16.mxu0 0
    %883 = vmatpush1.bf16.msra.mxu0 0
    %884 = vmatprep.subr.bf16.mxu0 0
    %885 = vmatpush1.bf16.msra.mxu0 0
    %886 = vmatprep.subr.bf16.mxu0 0
    %887 = vmatpush1.bf16.msra.mxu0 0
    %888 = vmatprep.subr.bf16.mxu0 0
    %889 = vmatpush1.bf16.msra.mxu0 0
    %890 = vmatprep.mubr.bf16.mxu0 %v856
    %891 = vmatmul.mubr.bf16.gmra.mrb[0].mxu0 %v757
    %v892 = vpop.f32.mrb[0].mxu0
    %v893 = vadd.f32 0.0, %v892
    %v894 = vpop.f32.mrb[0].mxu0
    %v895 = vpop.f32.mrb[0].mxu0
    %v896 = vadd.f32 0.0, %v895
    %v897 = vpop.f32.mrb[0].mxu0
    %898 = vdwg.mxu0
    %v899 = vpack.c.bf16 %v896, %v893
    %v900 = vld [vmem:[#allocation2 + $0x1a0] sm:$0xf]
    %v901 = vld [vmem:[#allocation2 + $0x1a4] sm:$0xf]
    %v902 = vld [vmem:[#allocation2 + $0x1a8] sm:$0xf]
    %v903 = vld [vmem:[#allocation2 + $0x1ac] sm:$0xf]
    %v904 = vld [vmem:[#allocation2 + $0x1b0] sm:$0xf]
    %v905 = vld [vmem:[#allocation2 + $0x1b4] sm:$0xf]
    %v906 = vld [vmem:[#allocation2 + $0x1b8] sm:$0xf]
    %v907 = vld [vmem:[#allocation2 + $0x1bc] sm:$0xf]
    %v908 = vld [vmem:[#allocation2 + $0x1c0] sm:$0xf]
    %v909 = vld [vmem:[#allocation2 + $0x1c4] sm:$0xf]
    %v910 = vld [vmem:[#allocation2 + $0x1c8] sm:$0xf]
    %v911 = vld [vmem:[#allocation2 + $0x1cc] sm:$0xf]
    %v912 = vld [vmem:[#allocation2 + $0x1d0] sm:$0xf]
    %v913 = vld [vmem:[#allocation2 + $0x1d4] sm:$0xf]
    %v914 = vld [vmem:[#allocation2 + $0x1d8] sm:$0xf]
    %v915 = vld [vmem:[#allocation2 + $0x1dc] sm:$0xf]
    %v932 = vunpack.c.l.b16 %v900
    %v933 = vunpack.c.l.b16 %v901
    %v934 = vunpack.c.l.b16 %v902
    %v935 = vunpack.c.l.b16 %v903
    %v936 = vunpack.c.l.b16 %v904
    %v937 = vunpack.c.l.b16 %v905
    %v938 = vunpack.c.l.b16 %v906
    %v939 = vunpack.c.l.b16 %v907
    %v940 = vunpack.c.l.b16 %v908
    %v941 = vunpack.c.l.b16 %v909
    %v942 = vunpack.c.l.b16 %v910
    %v943 = vunpack.c.l.b16 %v911
    %v944 = vunpack.c.l.b16 %v912
    %v945 = vunpack.c.l.b16 %v913
    %v946 = vunpack.c.l.b16 %v914
    %v947 = vunpack.c.l.b16 %v915
    %v948 = vpack.c.b16 %v933, %v932
    %v949 = vpack.c.b16 %v935, %v934
    %v950 = vpack.c.b16 %v937, %v936
    %v951 = vpack.c.b16 %v939, %v938
    %v952 = vpack.c.b16 %v941, %v940
    %v953 = vpack.c.b16 %v943, %v942
    %v954 = vpack.c.b16 %v945, %v944
    %v955 = vpack.c.b16 %v947, %v946
    %964 = vmatprep.subr.bf16.mxu0 0
    %965 = vmatpush1.bf16.msra.mxu0 %v948
    %966 = vmatprep.subr.bf16.mxu0 0
    %967 = vmatpush1.bf16.msra.mxu0 %v949
    %968 = vmatprep.subr.bf16.mxu0 0
    %969 = vmatpush1.bf16.msra.mxu0 %v950
    %970 = vmatprep.subr.bf16.mxu0 0
    %971 = vmatpush1.bf16.msra.mxu0 %v951
    %972 = vmatprep.subr.bf16.mxu0 0
    %973 = vmatpush1.bf16.msra.mxu0 %v952
    %974 = vmatprep.subr.bf16.mxu0 0
    %975 = vmatpush1.bf16.msra.mxu0 %v953
    %976 = vmatprep.subr.bf16.mxu0 0
    %977 = vmatpush1.bf16.msra.mxu0 %v954
    %978 = vmatprep.subr.bf16.mxu0 0
    %979 = vmatpush1.bf16.msra.mxu0 %v955
    %980 = vmatprep.subr.bf16.mxu0 0
    %981 = vmatpush1.bf16.msra.mxu0 0
    %982 = vmatprep.subr.bf16.mxu0 0
    %983 = vmatpush1.bf16.msra.mxu0 0
    %984 = vmatprep.subr.bf16.mxu0 0
    %985 = vmatpush1.bf16.msra.mxu0 0
    %986 = vmatprep.subr.bf16.mxu0 0
    %987 = vmatpush1.bf16.msra.mxu0 0
    %988 = vmatprep.subr.bf16.mxu0 0
    %989 = vmatpush1.bf16.msra.mxu0 0
    %990 = vmatprep.subr.bf16.mxu0 0
    %991 = vmatpush1.bf16.msra.mxu0 0
    %992 = vmatprep.subr.bf16.mxu0 0
    %993 = vmatpush1.bf16.msra.mxu0 0
    %994 = vmatprep.subr.bf16.mxu0 0
    %995 = vmatpush1.bf16.msra.mxu0 0
    %996 = vmatprep.mubr.bf16.mxu0 0
    %997 = vmatmul.mubr.bf16.gmra.mrb[0].mxu0 %v899
    %v998 = vpop.f32.mrb[0].mxu0
    %v999 = vadd.f32 0.0, %v998
    %v1000 = vpop.f32.mrb[0].mxu0
    %v1001 = vpop.f32.mrb[0].mxu0
    %v1002 = vadd.f32 0.0, %v1001
    %v1003 = vpop.f32.mrb[0].mxu0
    %1004 = vdwg.mxu0
    %v1005 = vpack.c.bf16 %v1002, %v999
    %v1006 = vld [vmem:[#allocation2 + $0x180] sm:$0x1]
    %v1008 = vsel %vm653, %v1006, 0
    %1010 = vmatprep.subr.bf16.mxu0 0
    %1011 = vmatpush1.bf16.msra.mxu0 %v1005
    %1012 = vmatprep.subr.bf16.mxu0 0
    %1013 = vmatpush1.bf16.msra.mxu0 0
    %1014 = vmatprep.subr.bf16.mxu0 0
    %1015 = vmatpush1.bf16.msra.mxu0 0
    %1016 = vmatprep.subr.bf16.mxu0 0
    %1017 = vmatpush1.bf16.msra.mxu0 0
    %1018 = vmatprep.subr.bf16.mxu0 0
    %1019 = vmatpush1.bf16.msra.mxu0 0
    %1020 = vmatprep.subr.bf16.mxu0 0
    %1021 = vmatpush1.bf16.msra.mxu0 0
    %1022 = vmatprep.subr.bf16.mxu0 0
    %1023 = vmatpush1.bf16.msra.mxu0 0
    %1024 = vmatprep.subr.bf16.mxu0 0
    %1025 = vmatpush1.bf16.msra.mxu0 0
    %1026 = vmatprep.subr.bf16.mxu0 0
    %1027 = vmatpush1.bf16.msra.mxu0 0
    %1028 = vmatprep.subr.bf16.mxu0 0
    %1029 = vmatpush1.bf16.msra.mxu0 0
    %1030 = vmatprep.subr.bf16.mxu0 0
    %1031 = vmatpush1.bf16.msra.mxu0 0
    %1032 = vmatprep.subr.bf16.mxu0 0
    %1033 = vmatpush1.bf16.msra.mxu0 0
    %1034 = vmatprep.subr.bf16.mxu0 0
    %1035 = vmatpush1.bf16.msra.mxu0 0
    %1036 = vmatprep.subr.bf16.mxu0 0
    %1037 = vmatpush1.bf16.msra.mxu0 0
    %1038 = vmatprep.subr.bf16.mxu0 0
    %1039 = vmatpush1.bf16.msra.mxu0 0
    %1040 = vmatprep.subr.bf16.mxu0 0
    %1041 = vmatpush1.bf16.msra.mxu0 0
    %1042 = vmatprep.mubr.bf16.mxu0 0
    %1043 = vmatmul.mubr.bf16.gmra.mrb[0].mxu0 %v1008
    %v1044 = vpop.f32.mrb[0].mxu0
    %v1045 = vadd.f32 0.0, %v1044
    %v1046 = vpop.f32.mrb[0].mxu0
    %v1047 = vpop.f32.mrb[0].mxu0
    %v1048 = vpop.f32.mrb[0].mxu0
    %1049 = vdwg.mxu0
    %vm1050 = vcmp.gt.f32.partialorder %v1045, 0.0
    %v1051 = vmul.f32 %v1045, 0.01
    %v1052 = vsel %vm1050, %v1045, %v1051
    %v1053 = vpack.c.bf16 %v1052, %v1052
    %v1054 = vld [vmem:[#allocation2 + $0x1e0] sm:$0xf]
    %v1055 = vld [vmem:[#allocation2 + $0x1e4] sm:$0xf]
    %v1056 = vld [vmem:[#allocation2 + $0x1e8] sm:$0xf]
    %v1057 = vld [vmem:[#allocation2 + $0x1ec] sm:$0xf]
    %v1058 = vld [vmem:[#allocation2 + $0x1f0] sm:$0xf]
    %v1059 = vld [vmem:[#allocation2 + $0x1f4] sm:$0xf]
    %v1060 = vld [vmem:[#allocation2 + $0x1f8] sm:$0xf]
    %v1061 = vld [vmem:[#allocation2 + $0x1fc] sm:$0xf]
    %v1062 = vld [vmem:[#allocation2 + $0x188] sm:$0x1]
    %v1064 = vsel %vm653, %v1062, 0
    %1066 = vmatprep.subr.bf16.mxu0 0
    %1067 = vmatpush1.bf16.msra.mxu0 %v1005
    %1068 = vmatprep.subr.bf16.mxu0 0
    %1069 = vmatpush1.bf16.msra.mxu0 0
    %1070 = vmatprep.subr.bf16.mxu0 0
    %1071 = vmatpush1.bf16.msra.mxu0 0
    %1072 = vmatprep.subr.bf16.mxu0 0
    %1073 = vmatpush1.bf16.msra.mxu0 0
    %1074 = vmatprep.subr.bf16.mxu0 0
    %1075 = vmatpush1.bf16.msra.mxu0 0
    %1076 = vmatprep.subr.bf16.mxu0 0
    %1077 = vmatpush1.bf16.msra.mxu0 0
    %1078 = vmatprep.subr.bf16.mxu0 0
    %1079 = vmatpush1.bf16.msra.mxu0 0
    %1080 = vmatprep.subr.bf16.mxu0 0
    %1081 = vmatpush1.bf16.msra.mxu0 0
    %1082 = vmatprep.subr.bf16.mxu0 0
    %1083 = vmatpush1.bf16.msra.mxu0 0
    %1084 = vmatprep.subr.bf16.mxu0 0
    %1085 = vmatpush1.bf16.msra.mxu0 0
    %1086 = vmatprep.subr.bf16.mxu0 0
    %1087 = vmatpush1.bf16.msra.mxu0 0
    %1088 = vmatprep.subr.bf16.mxu0 0
    %1089 = vmatpush1.bf16.msra.mxu0 0
    %1090 = vmatprep.subr.bf16.mxu0 0
    %1091 = vmatpush1.bf16.msra.mxu0 0
    %1092 = vmatprep.subr.bf16.mxu0 0
    %1093 = vmatpush1.bf16.msra.mxu0 0
    %1094 = vmatprep.subr.bf16.mxu0 0
    %1095 = vmatpush1.bf16.msra.mxu0 0
    %1096 = vmatprep.subr.bf16.mxu0 0
    %1097 = vmatpush1.bf16.msra.mxu0 0
    %1098 = vmatprep.mubr.bf16.mxu0 0
    %1099 = vmatmul.mubr.bf16.gmra.mrb[0].mxu0 %v1064
    %v1100 = vpop.f32.mrb[0].mxu0
    %v1101 = vadd.f32 0.0, %v1100
    %v1102 = vpop.f32.mrb[0].mxu0
    %v1103 = vpop.f32.mrb[0].mxu0
    %v1104 = vpop.f32.mrb[0].mxu0
    %1105 = vdwg.mxu0
    %vm1106 = vcmp.gt.f32.partialorder %v1101, 0.0
    %v1107 = vmul.f32 %v1101, 0.01
    %v1108 = vsel %vm1106, %v1101, %v1107
    %v1109 = vpack.c.bf16 %v1108, %v1108
    %v1110 = vld [vmem:[#allocation2 + $0x200] sm:$0xf]
    %v1111 = vld [vmem:[#allocation2 + $0x204] sm:$0xf]
    %v1112 = vld [vmem:[#allocation2 + $0x208] sm:$0xf]
    %v1113 = vld [vmem:[#allocation2 + $0x20c] sm:$0xf]
    %v1114 = vld [vmem:[#allocation2 + $0x210] sm:$0xf]
    %v1115 = vld [vmem:[#allocation2 + $0x214] sm:$0xf]
    %v1116 = vld [vmem:[#allocation2 + $0x218] sm:$0xf]
    %v1117 = vld [vmem:[#allocation2 + $0x21c] sm:$0xf]
    %v1126 = vunpack.c.l.b16 %v1110
    %v1127 = vunpack.c.l.b16 %v1111
    %v1128 = vunpack.c.l.b16 %v1112
    %v1129 = vunpack.c.l.b16 %v1113
    %v1130 = vunpack.c.l.b16 %v1114
    %v1131 = vunpack.c.l.b16 %v1115
    %v1132 = vunpack.c.l.b16 %v1116
    %v1133 = vunpack.c.l.b16 %v1117
    %v1134 = vpack.c.b16 %v1127, %v1126
    %v1135 = vpack.c.b16 %v1129, %v1128
    %v1136 = vpack.c.b16 %v1131, %v1130
    %v1137 = vpack.c.b16 %v1133, %v1132
    %v1143 = vsel %vm191, %v1109, 0
    %1145 = vmatprep.subr.bf16.mxu0 0
    %1146 = vmatpush1.bf16.msra.mxu0 %v1134
    %1147 = vmatprep.subr.bf16.mxu0 0
    %1148 = vmatpush1.bf16.msra.mxu0 %v1135
    %1149 = vmatprep.subr.bf16.mxu0 0
    %1150 = vmatpush1.bf16.msra.mxu0 %v1136
    %1151 = vmatprep.subr.bf16.mxu0 0
    %1152 = vmatpush1.bf16.msra.mxu0 %v1137
    %1153 = vmatprep.subr.bf16.mxu0 0
    %1154 = vmatpush1.bf16.msra.mxu0 0
    %1155 = vmatprep.subr.bf16.mxu0 0
    %1156 = vmatpush1.bf16.msra.mxu0 0
    %1157 = vmatprep.subr.bf16.mxu0 0
    %1158 = vmatpush1.bf16.msra.mxu0 0
    %1159 = vmatprep.subr.bf16.mxu0 0
    %1160 = vmatpush1.bf16.msra.mxu0 0
    %1161 = vmatprep.subr.bf16.mxu0 0
    %1162 = vmatpush1.bf16.msra.mxu0 0
    %1163 = vmatprep.subr.bf16.mxu0 0
    %1164 = vmatpush1.bf16.msra.mxu0 0
    %1165 = vmatprep.subr.bf16.mxu0 0
    %1166 = vmatpush1.bf16.msra.mxu0 0
    %1167 = vmatprep.subr.bf16.mxu0 0
    %1168 = vmatpush1.bf16.msra.mxu0 0
    %1169 = vmatprep.subr.bf16.mxu0 0
    %1170 = vmatpush1.bf16.msra.mxu0 0
    %1171 = vmatprep.subr.bf16.mxu0 0
    %1172 = vmatpush1.bf16.msra.mxu0 0
    %1173 = vmatprep.subr.bf16.mxu0 0
    %1174 = vmatpush1.bf16.msra.mxu0 0
    %1175 = vmatprep.subr.bf16.mxu0 0
    %1176 = vmatpush1.bf16.msra.mxu0 0
    %1177 = vmatprep.mubr.bf16.mxu0 0
    %1178 = vmatmul.mubr.bf16.gmra.mrb[0].mxu0 %v1143
    %v1179 = vpop.f32.mrb[0].mxu0
    %v1180 = vadd.f32 0.0, %v1179
    %v1181 = vpop.f32.mrb[0].mxu0
    %v1182 = vpop.f32.mrb[0].mxu0
    %v1183 = vpop.f32.mrb[0].mxu0
    %1184 = vdwg.mxu0
    %v1193 = vunpack.c.l.b16 %v1054
    %v1194 = vunpack.c.l.b16 %v1055
    %v1195 = vunpack.c.l.b16 %v1056
    %v1196 = vunpack.c.l.b16 %v1057
    %v1197 = vunpack.c.l.b16 %v1058
    %v1198 = vunpack.c.l.b16 %v1059
    %v1199 = vunpack.c.l.b16 %v1060
    %v1200 = vunpack.c.l.b16 %v1061
    %v1201 = vpack.c.b16 %v1194, %v1193
    %v1202 = vpack.c.b16 %v1196, %v1195
    %v1203 = vpack.c.b16 %v1198, %v1197
    %v1204 = vpack.c.b16 %v1200, %v1199
    %v1210 = vsel %vm191, %v1053, 0
    %1212 = vmatprep.subr.bf16.mxu0 0
    %1213 = vmatpush1.bf16.msra.mxu0 %v1201
    %1214 = vmatprep.subr.bf16.mxu0 0
    %1215 = vmatpush1.bf16.msra.mxu0 %v1202
    %1216 = vmatprep.subr.bf16.mxu0 0
    %1217 = vmatpush1.bf16.msra.mxu0 %v1203
    %1218 = vmatprep.subr.bf16.mxu0 0
    %1219 = vmatpush1.bf16.msra.mxu0 %v1204
    %1220 = vmatprep.subr.bf16.mxu0 0
    %1221 = vmatpush1.bf16.msra.mxu0 0
    %1222 = vmatprep.subr.bf16.mxu0 0
    %1223 = vmatpush1.bf16.msra.mxu0 0
    %1224 = vmatprep.subr.bf16.mxu0 0
    %1225 = vmatpush1.bf16.msra.mxu0 0
    %1226 = vmatprep.subr.bf16.mxu0 0
    %1227 = vmatpush1.bf16.msra.mxu0 0
    %1228 = vmatprep.subr.bf16.mxu0 0
    %1229 = vmatpush1.bf16.msra.mxu0 0
    %1230 = vmatprep.subr.bf16.mxu0 0
    %1231 = vmatpush1.bf16.msra.mxu0 0
    %1232 = vmatprep.subr.bf16.mxu0 0
    %1233 = vmatpush1.bf16.msra.mxu0 0
    %1234 = vmatprep.subr.bf16.mxu0 0
    %1235 = vmatpush1.bf16.msra.mxu0 0
    %1236 = vmatprep.subr.bf16.mxu0 0
    %1237 = vmatpush1.bf16.msra.mxu0 0
    %1238 = vmatprep.subr.bf16.mxu0 0
    %1239 = vmatpush1.bf16.msra.mxu0 0
    %1240 = vmatprep.subr.bf16.mxu0 0
    %1241 = vmatpush1.bf16.msra.mxu0 0
    %1242 = vmatprep.subr.bf16.mxu0 0
    %1243 = vmatpush1.bf16.msra.mxu0 0
    %1244 = vmatprep.mubr.bf16.mxu0 0
    %1245 = vmatmul.mubr.bf16.gmra.mrb[0].mxu0 %v1210
    %v1246 = vpop.f32.mrb[0].mxu0
    %v1247 = vadd.f32 %v1180, %v1246
    %v1248 = vpop.f32.mrb[0].mxu0
    %v1249 = vpop.f32.mrb[0].mxu0
    %v1250 = vpop.f32.mrb[0].mxu0
    %1251 = vdwg.mxu0
    %v1252 = vld [vmem:[#allocation2 + $0x190] sm:$0x1]
    %v1254 = vsel %vm653, %v1252, 0
    %1256 = vmatprep.subr.bf16.mxu0 0
    %1257 = vmatpush1.bf16.msra.mxu0 %v1005
    %1258 = vmatprep.subr.bf16.mxu0 0
    %1259 = vmatpush1.bf16.msra.mxu0 0
    %1260 = vmatprep.subr.bf16.mxu0 0
    %1261 = vmatpush1.bf16.msra.mxu0 0
    %1262 = vmatprep.subr.bf16.mxu0 0
    %1263 = vmatpush1.bf16.msra.mxu0 0
    %1264 = vmatprep.subr.bf16.mxu0 0
    %1265 = vmatpush1.bf16.msra.mxu0 0
    %1266 = vmatprep.subr.bf16.mxu0 0
    %1267 = vmatpush1.bf16.msra.mxu0 0
    %1268 = vmatprep.subr.bf16.mxu0 0
    %1269 = vmatpush1.bf16.msra.mxu0 0
    %1270 = vmatprep.subr.bf16.mxu0 0
    %1271 = vmatpush1.bf16.msra.mxu0 0
    %1272 = vmatprep.subr.bf16.mxu0 0
    %1273 = vmatpush1.bf16.msra.mxu0 0
    %1274 = vmatprep.subr.bf16.mxu0 0
    %1275 = vmatpush1.bf16.msra.mxu0 0
    %1276 = vmatprep.subr.bf16.mxu0 0
    %1277 = vmatpush1.bf16.msra.mxu0 0
    %1278 = vmatprep.subr.bf16.mxu0 0
    %1279 = vmatpush1.bf16.msra.mxu0 0
    %1280 = vmatprep.subr.bf16.mxu0 0
    %1281 = vmatpush1.bf16.msra.mxu0 0
    %1282 = vmatprep.subr.bf16.mxu0 0
    %1283 = vmatpush1.bf16.msra.mxu0 0
    %1284 = vmatprep.subr.bf16.mxu0 0
    %1285 = vmatpush1.bf16.msra.mxu0 0
    %1286 = vmatprep.subr.bf16.mxu0 0
    %1287 = vmatpush1.bf16.msra.mxu0 0
    %1288 = vmatprep.mubr.bf16.mxu0 0
    %1289 = vmatmul.mubr.bf16.gmra.mrb[0].mxu0 %v1254
    %v1290 = vpop.f32.mrb[0].mxu0
    %v1291 = vadd.f32 0.0, %v1290
    %v1292 = vpop.f32.mrb[0].mxu0
    %v1293 = vpop.f32.mrb[0].mxu0
    %v1294 = vpop.f32.mrb[0].mxu0
    %1295 = vdwg.mxu0
    %vm1296 = vcmp.gt.f32.partialorder %v1291, 0.0
    %v1297 = vmul.f32 %v1291, 0.01
    %v1298 = vsel %vm1296, %v1291, %v1297
    %v1299 = vpack.c.bf16 %v1298, %v1298
    %v1300 = vld [vmem:[#allocation2 + $0x220] sm:$0xf]
    %v1301 = vld [vmem:[#allocation2 + $0x224] sm:$0xf]
    %v1302 = vld [vmem:[#allocation2 + $0x228] sm:$0xf]
    %v1303 = vld [vmem:[#allocation2 + $0x22c] sm:$0xf]
    %v1304 = vld [vmem:[#allocation2 + $0x230] sm:$0xf]
    %v1305 = vld [vmem:[#allocation2 + $0x234] sm:$0xf]
    %v1306 = vld [vmem:[#allocation2 + $0x238] sm:$0xf]
    %v1307 = vld [vmem:[#allocation2 + $0x23c] sm:$0xf]
    %v1316 = vunpack.c.l.b16 %v1300
    %v1317 = vunpack.c.l.b16 %v1301
    %v1318 = vunpack.c.l.b16 %v1302
    %v1319 = vunpack.c.l.b16 %v1303
    %v1320 = vunpack.c.l.b16 %v1304
    %v1321 = vunpack.c.l.b16 %v1305
    %v1322 = vunpack.c.l.b16 %v1306
    %v1323 = vunpack.c.l.b16 %v1307
    %v1324 = vpack.c.b16 %v1317, %v1316
    %v1325 = vpack.c.b16 %v1319, %v1318
    %v1326 = vpack.c.b16 %v1321, %v1320
    %v1327 = vpack.c.b16 %v1323, %v1322
    %v1333 = vsel %vm191, %v1299, 0
    %1335 = vmatprep.subr.bf16.mxu0 0
    %1336 = vmatpush1.bf16.msra.mxu0 %v1324
    %1337 = vmatprep.subr.bf16.mxu0 0
    %1338 = vmatpush1.bf16.msra.mxu0 %v1325
    %1339 = vmatprep.subr.bf16.mxu0 0
    %1340 = vmatpush1.bf16.msra.mxu0 %v1326
    %1341 = vmatprep.subr.bf16.mxu0 0
    %1342 = vmatpush1.bf16.msra.mxu0 %v1327
    %1343 = vmatprep.subr.bf16.mxu0 0
    %1344 = vmatpush1.bf16.msra.mxu0 0
    %1345 = vmatprep.subr.bf16.mxu0 0
    %1346 = vmatpush1.bf16.msra.mxu0 0
    %1347 = vmatprep.subr.bf16.mxu0 0
    %1348 = vmatpush1.bf16.msra.mxu0 0
    %1349 = vmatprep.subr.bf16.mxu0 0
    %1350 = vmatpush1.bf16.msra.mxu0 0
    %1351 = vmatprep.subr.bf16.mxu0 0
    %1352 = vmatpush1.bf16.msra.mxu0 0
    %1353 = vmatprep.subr.bf16.mxu0 0
    %1354 = vmatpush1.bf16.msra.mxu0 0
    %1355 = vmatprep.subr.bf16.mxu0 0
    %1356 = vmatpush1.bf16.msra.mxu0 0
    %1357 = vmatprep.subr.bf16.mxu0 0
    %1358 = vmatpush1.bf16.msra.mxu0 0
    %1359 = vmatprep.subr.bf16.mxu0 0
    %1360 = vmatpush1.bf16.msra.mxu0 0
    %1361 = vmatprep.subr.bf16.mxu0 0
    %1362 = vmatpush1.bf16.msra.mxu0 0
    %1363 = vmatprep.subr.bf16.mxu0 0
    %1364 = vmatpush1.bf16.msra.mxu0 0
    %1365 = vmatprep.subr.bf16.mxu0 0
    %1366 = vmatpush1.bf16.msra.mxu0 0
    %1367 = vmatprep.mubr.bf16.mxu0 0
    %1368 = vmatmul.mubr.bf16.gmra.mrb[0].mxu0 %v1333
    %v1369 = vpop.f32.mrb[0].mxu0
    %v1370 = vadd.f32 0.0, %v1369
    %v1371 = vpop.f32.mrb[0].mxu0
    %v1372 = vpop.f32.mrb[0].mxu0
    %v1373 = vpop.f32.mrb[0].mxu0
    %1374 = vdwg.mxu0
    %v1375 = vadd.f32 %v1247, %v1370
    %v1376 = vld [vmem:[#allocation2 + $0x198] sm:$0x1]
    %v1378 = vsel %vm653, %v1376, 0
    %1380 = vmatprep.subr.bf16.mxu0 0
    %1381 = vmatpush1.bf16.msra.mxu0 %v1005
    %1382 = vmatprep.subr.bf16.mxu0 0
    %1383 = vmatpush1.bf16.msra.mxu0 0
    %1384 = vmatprep.subr.bf16.mxu0 0
    %1385 = vmatpush1.bf16.msra.mxu0 0
    %1386 = vmatprep.subr.bf16.mxu0 0
    %1387 = vmatpush1.bf16.msra.mxu0 0
    %1388 = vmatprep.subr.bf16.mxu0 0
    %1389 = vmatpush1.bf16.msra.mxu0 0
    %1390 = vmatprep.subr.bf16.mxu0 0
    %1391 = vmatpush1.bf16.msra.mxu0 0
    %1392 = vmatprep.subr.bf16.mxu0 0
    %1393 = vmatpush1.bf16.msra.mxu0 0
    %1394 = vmatprep.subr.bf16.mxu0 0
    %1395 = vmatpush1.bf16.msra.mxu0 0
    %1396 = vmatprep.subr.bf16.mxu0 0
    %1397 = vmatpush1.bf16.msra.mxu0 0
    %1398 = vmatprep.subr.bf16.mxu0 0
    %1399 = vmatpush1.bf16.msra.mxu0 0
    %1400 = vmatprep.subr.bf16.mxu0 0
    %1401 = vmatpush1.bf16.msra.mxu0 0
    %1402 = vmatprep.subr.bf16.mxu0 0
    %1403 = vmatpush1.bf16.msra.mxu0 0
    %1404 = vmatprep.subr.bf16.mxu0 0
    %1405 = vmatpush1.bf16.msra.mxu0 0
    %1406 = vmatprep.subr.bf16.mxu0 0
    %1407 = vmatpush1.bf16.msra.mxu0 0
    %1408 = vmatprep.subr.bf16.mxu0 0
    %1409 = vmatpush1.bf16.msra.mxu0 0
    %1410 = vmatprep.subr.bf16.mxu0 0
    %1411 = vmatpush1.bf16.msra.mxu0 0
    %1412 = vmatprep.mubr.bf16.mxu0 0
    %1413 = vmatmul.mubr.bf16.gmra.mrb[0].mxu0 %v1378
    %v1414 = vpop.f32.mrb[0].mxu0
    %v1415 = vadd.f32 0.0, %v1414
    %v1416 = vpop.f32.mrb[0].mxu0
    %v1417 = vpop.f32.mrb[0].mxu0
    %v1418 = vpop.f32.mrb[0].mxu0
    %1419 = vdwg.mxu0
    %vm1420 = vcmp.gt.f32.partialorder %v1415, 0.0
    %v1421 = vmul.f32 %v1415, 0.01
    %v1422 = vsel %vm1420, %v1415, %v1421
    %v1423 = vpack.c.bf16 %v1422, %v1422
    %v1424 = vld [vmem:[#allocation2 + $0x240] sm:$0xf]
    %v1425 = vld [vmem:[#allocation2 + $0x244] sm:$0xf]
    %v1426 = vld [vmem:[#allocation2 + $0x248] sm:$0xf]
    %v1427 = vld [vmem:[#allocation2 + $0x24c] sm:$0xf]
    %v1428 = vld [vmem:[#allocation2 + $0x250] sm:$0xf]
    %v1429 = vld [vmem:[#allocation2 + $0x254] sm:$0xf]
    %v1430 = vld [vmem:[#allocation2 + $0x258] sm:$0xf]
    %v1431 = vld [vmem:[#allocation2 + $0x25c] sm:$0xf]
    %v1440 = vunpack.c.l.b16 %v1424
    %v1441 = vunpack.c.l.b16 %v1425
    %v1442 = vunpack.c.l.b16 %v1426
    %v1443 = vunpack.c.l.b16 %v1427
    %v1444 = vunpack.c.l.b16 %v1428
    %v1445 = vunpack.c.l.b16 %v1429
    %v1446 = vunpack.c.l.b16 %v1430
    %v1447 = vunpack.c.l.b16 %v1431
    %v1448 = vpack.c.b16 %v1441, %v1440
    %v1449 = vpack.c.b16 %v1443, %v1442
    %v1450 = vpack.c.b16 %v1445, %v1444
    %v1451 = vpack.c.b16 %v1447, %v1446
    %v1457 = vsel %vm191, %v1423, 0
    %1459 = vmatprep.subr.bf16.mxu0 0
    %1460 = vmatpush1.bf16.msra.mxu0 %v1448
    %1461 = vmatprep.subr.bf16.mxu0 0
    %1462 = vmatpush1.bf16.msra.mxu0 %v1449
    %1463 = vmatprep.subr.bf16.mxu0 0
    %1464 = vmatpush1.bf16.msra.mxu0 %v1450
    %1465 = vmatprep.subr.bf16.mxu0 0
    %1466 = vmatpush1.bf16.msra.mxu0 %v1451
    %1467 = vmatprep.subr.bf16.mxu0 0
    %1468 = vmatpush1.bf16.msra.mxu0 0
    %1469 = vmatprep.subr.bf16.mxu0 0
    %1470 = vmatpush1.bf16.msra.mxu0 0
    %1471 = vmatprep.subr.bf16.mxu0 0
    %1472 = vmatpush1.bf16.msra.mxu0 0
    %1473 = vmatprep.subr.bf16.mxu0 0
    %1474 = vmatpush1.bf16.msra.mxu0 0
    %1475 = vmatprep.subr.bf16.mxu0 0
    %1476 = vmatpush1.bf16.msra.mxu0 0
    %1477 = vmatprep.subr.bf16.mxu0 0
    %1478 = vmatpush1.bf16.msra.mxu0 0
    %1479 = vmatprep.subr.bf16.mxu0 0
    %1480 = vmatpush1.bf16.msra.mxu0 0
    %1481 = vmatprep.subr.bf16.mxu0 0
    %1482 = vmatpush1.bf16.msra.mxu0 0
    %1483 = vmatprep.subr.bf16.mxu0 0
    %1484 = vmatpush1.bf16.msra.mxu0 0
    %1485 = vmatprep.subr.bf16.mxu0 0
    %1486 = vmatpush1.bf16.msra.mxu0 0
    %1487 = vmatprep.subr.bf16.mxu0 0
    %1488 = vmatpush1.bf16.msra.mxu0 0
    %1489 = vmatprep.subr.bf16.mxu0 0
    %1490 = vmatpush1.bf16.msra.mxu0 0
    %1491 = vmatprep.mubr.bf16.mxu0 0
    %1492 = vmatmul.mubr.bf16.gmra.mrb[0].mxu0 %v1457
    %v1493 = vpop.f32.mrb[0].mxu0
    %v1494 = vadd.f32 0.0, %v1493
    %v1495 = vpop.f32.mrb[0].mxu0
    %v1496 = vpop.f32.mrb[0].mxu0
    %v1497 = vpop.f32.mrb[0].mxu0
    %1498 = vdwg.mxu0
    %v1499 = vadd.f32 %v1375, %v1494
    %v1500 = vld [vmem:[%s2] sm:$0x1]
    %v1501 = vld [vmem:[%s2 + $0x8] sm:$0x1]
    %v1502 = vld [vmem:[%s2 + $0x10] sm:$0x1]
    %v1503 = vlaneseq
    %v1504 = vshrl.u32 %v1503, 7
    %v1505 = vsub.s32 0, %v1504
    %v1506 = vrot.slane %v1500, %v1505
    %v1507 = vadd.f32 %v1499, %v1506
    %vm1508 = vcmp.gt.f32.partialorder %v1507, 0.0
    %v1509 = vmul.f32 %v1507, 0.01
    %v1510 = vsel %vm1508, %v1507, %v1509
    %v1511 = vpack.c.bf16 %v1510, %v1510
    %v1512 = vld [vmem:[#allocation2 + $0x260] sm:$0xf]
    %v1513 = vld [vmem:[#allocation2 + $0x264] sm:$0xf]
    %v1514 = vld [vmem:[#allocation2 + $0x268] sm:$0xf]
    %v1515 = vld [vmem:[#allocation2 + $0x26c] sm:$0xf]
    %v1516 = vlaneseq
    %v1517 = vshrl.u32 %v1516, 7
    %v1518 = vsub.s32 0, %v1517
    %v1519 = vrot.slane %v1501, %v1518
    %v1524 = vunpack.c.l.b16 %v1512
    %v1525 = vunpack.c.l.b16 %v1513
    %v1526 = vunpack.c.l.b16 %v1514
    %v1527 = vunpack.c.l.b16 %v1515
    %v1528 = vpack.c.b16 %v1525, %v1524
    %v1529 = vpack.c.b16 %v1527, %v1526
    %v1533 = vsel %vm54, %v1511, 0
    %1535 = vmatprep.subr.bf16.mxu0 0
    %1536 = vmatpush1.bf16.msra.mxu0 %v1528
    %1537 = vmatprep.subr.bf16.mxu0 0
    %1538 = vmatpush1.bf16.msra.mxu0 %v1529
    %1539 = vmatprep.subr.bf16.mxu0 0
    %1540 = vmatpush1.bf16.msra.mxu0 0
    %1541 = vmatprep.subr.bf16.mxu0 0
    %1542 = vmatpush1.bf16.msra.mxu0 0
    %1543 = vmatprep.subr.bf16.mxu0 0
    %1544 = vmatpush1.bf16.msra.mxu0 0
    %1545 = vmatprep.subr.bf16.mxu0 0
    %1546 = vmatpush1.bf16.msra.mxu0 0
    %1547 = vmatprep.subr.bf16.mxu0 0
    %1548 = vmatpush1.bf16.msra.mxu0 0
    %1549 = vmatprep.subr.bf16.mxu0 0
    %1550 = vmatpush1.bf16.msra.mxu0 0
    %1551 = vmatprep.subr.bf16.mxu0 0
    %1552 = vmatpush1.bf16.msra.mxu0 0
    %1553 = vmatprep.subr.bf16.mxu0 0
    %1554 = vmatpush1.bf16.msra.mxu0 0
    %1555 = vmatprep.subr.bf16.mxu0 0
    %1556 = vmatpush1.bf16.msra.mxu0 0
    %1557 = vmatprep.subr.bf16.mxu0 0
    %1558 = vmatpush1.bf16.msra.mxu0 0
    %1559 = vmatprep.subr.bf16.mxu0 0
    %1560 = vmatpush1.bf16.msra.mxu0 0
    %1561 = vmatprep.subr.bf16.mxu0 0
    %1562 = vmatpush1.bf16.msra.mxu0 0
    %1563 = vmatprep.subr.bf16.mxu0 0
    %1564 = vmatpush1.bf16.msra.mxu0 0
    %1565 = vmatprep.subr.bf16.mxu0 0
    %1566 = vmatpush1.bf16.msra.mxu0 0
    %1567 = vmatprep.mubr.bf16.mxu0 0
    %1568 = vmatmul.mubr.bf16.gmra.mrb[0].mxu0 %v1533
    %v1569 = vpop.f32.mrb[0].mxu0
    %v1570 = vadd.f32 %v1519, %v1569
    %v1571 = vpop.f32.mrb[0].mxu0
    %v1572 = vpop.f32.mrb[0].mxu0
    %v1573 = vpop.f32.mrb[0].mxu0
    %1574 = vdwg.mxu0
    %vm1575 = vcmp.gt.f32.partialorder %v1570, 0.0
    %v1576 = vmul.f32 %v1570, 0.01
    %v1577 = vsel %vm1575, %v1570, %v1576
    %v1578 = vpack.c.bf16 %v1577, %v1577
    %v1579 = vld [vmem:[#allocation2 + $0x270] sm:$0xf]
    %v1580 = vld [vmem:[#allocation2 + $0x274] sm:$0xf]
    %v1581 = vld [vmem:[#allocation2 + $0x278] sm:$0xf]
    %v1582 = vld [vmem:[#allocation2 + $0x27c] sm:$0xf]
    %v1583 = vlaneseq
    %v1584 = vshrl.u32 %v1583, 7
    %v1585 = vsub.s32 0, %v1584
    %v1586 = vrot.slane %v1502, %v1585
    %v1591 = vunpack.c.l.b16 %v1579
    %v1592 = vunpack.c.l.b16 %v1580
    %v1593 = vunpack.c.l.b16 %v1581
    %v1594 = vunpack.c.l.b16 %v1582
    %v1595 = vpack.c.b16 %v1592, %v1591
    %v1596 = vpack.c.b16 %v1594, %v1593
    %v1600 = vsel %vm54, %v1578, 0
    %1602 = vmatprep.subr.bf16.mxu0 0
    %1603 = vmatpush1.bf16.msra.mxu0 %v1595
    %1604 = vmatprep.subr.bf16.mxu0 0
    %1605 = vmatpush1.bf16.msra.mxu0 %v1596
    %1606 = vmatprep.subr.bf16.mxu0 0
    %1607 = vmatpush1.bf16.msra.mxu0 0
    %1608 = vmatprep.subr.bf16.mxu0 0
    %1609 = vmatpush1.bf16.msra.mxu0 0
    %1610 = vmatprep.subr.bf16.mxu0 0
    %1611 = vmatpush1.bf16.msra.mxu0 0
    %1612 = vmatprep.subr.bf16.mxu0 0
    %1613 = vmatpush1.bf16.msra.mxu0 0
    %1614 = vmatprep.subr.bf16.mxu0 0
    %1615 = vmatpush1.bf16.msra.mxu0 0
    %1616 = vmatprep.subr.bf16.mxu0 0
    %1617 = vmatpush1.bf16.msra.mxu0 0
    %1618 = vmatprep.subr.bf16.mxu0 0
    %1619 = vmatpush1.bf16.msra.mxu0 0
    %1620 = vmatprep.subr.bf16.mxu0 0
    %1621 = vmatpush1.bf16.msra.mxu0 0
    %1622 = vmatprep.subr.bf16.mxu0 0
    %1623 = vmatpush1.bf16.msra.mxu0 0
    %1624 = vmatprep.subr.bf16.mxu0 0
    %1625 = vmatpush1.bf16.msra.mxu0 0
    %1626 = vmatprep.subr.bf16.mxu0 0
    %1627 = vmatpush1.bf16.msra.mxu0 0
    %1628 = vmatprep.subr.bf16.mxu0 0
    %1629 = vmatpush1.bf16.msra.mxu0 0
    %1630 = vmatprep.subr.bf16.mxu0 0
    %1631 = vmatpush1.bf16.msra.mxu0 0
    %1632 = vmatprep.subr.bf16.mxu0 0
    %1633 = vmatpush1.bf16.msra.mxu0 0
    %1634 = vmatprep.mubr.bf16.mxu0 0
    %1635 = vmatmul.mubr.bf16.gmra.mrb[0].mxu0 %v1600
    %v1636 = vpop.f32.mrb[0].mxu0
    %v1637 = vadd.f32 %v1586, %v1636
    %v1638 = vpop.f32.mrb[0].mxu0
    %v1639 = vpop.f32.mrb[0].mxu0
    %v1640 = vpop.f32.mrb[0].mxu0
    %1641 = vdwg.mxu0
    %vm1642 = vcmask 1041408
    %v1643 = vsel %vm1642, %v1637, -inf
    %1644 = vmax.xlane.f32.xlu0 %v1643
    %v1645 = vpop.xlane.xlu0 %1644
    %v1646 = vsub.f32 %v1637, %v1645
    %v1647 = vmul.f32 %v1646, 1.442695
    %v1648 = vpow.pop %v1647
    %v1649 = vsel %vm1642, %v1648, 0.0
    %1650 = vadd.xlane.f32.xlu0 %v1649
    %v1651 = vpop.xlane.xlu0 %1650
    %v1652 = vrcp.pop %v1651
    %v1653 = vmul.f32 %v1648, %v1652
    %1654 = vst [vmem:[#allocation5] sm:$0x3] %v1653
    // Predicated region
    $region18: #{net_forward.1} parent=1 // pred_check
      _
    $region19: #{net_forward.1} parent=1 // pred_check_branch
      %1656 = sbr.rel (0) target = $region21
    $region20: #{net_forward.1} parent=1 // pred_region
      %s1658 = ssub.s32 32, 32
      %1659 = vsyncadd [#allocation4], %s1658
      %s1661 = sshll.u32 [#allocation5], 4
      %s1662 = int_to_ptr.vmem [resolvable:$true] %s1661
      %1664 = dma.vmem_to_hbm [thread:$0]  %s1662, 32, %s3, [#allocation4]
    $region21: #{net_forward.1} parent=1 // pred_fallthru
      _
    // Predicated region
    $region22: #{net_forward.1} parent=1 // pred_check
      _
    $region23: #{net_forward.1} parent=1 // pred_check_branch
      %1666 = sbr.rel (0) target = $region25
    $region24: #{net_forward.1} parent=1 // pred_region
      %1667 = dma.done [#allocation4], 32
    $region25: #{net_forward.1} parent=1 // pred_fallthru
      _
    %1668 = vsyncpa [#allocation3], 1
    %1669 = vsyncpa [#allocation4], 1

</llo_original>
